<compile_context>
chip_gen: v5e
topology: v5e:2x2
jax: 0.10.0
libtpu: 0.0.40
codegen_flags: <defaults>
</compile_context>

<pallas_src>
import functools

import jax
import jax.numpy as jnp
from jax import lax
from jax.experimental import pallas as pl
from jax.experimental.pallas import tpu as pltpu


def _make_kernel(tb, E, max_norm):
    def kernel(idx_ref,    # VMEM (tb, 1)              int32   batch tile of indices
               table_ref,  # VMEM (E, embed_dim)       bf16    pinned embedding table
               wtm_ref,    # VMEM (embed_dim, D_out)   bf16    pinned fused wt @ wm
               wm_ref,     # VMEM (D, D_out)           bf16    pinned main-net weight
               x_ref,      # VMEM (tb, D)              f32     batch tile of activations
               bf_ref,     # VMEM (1, D_out)           f32     fused bias  bt@wm + bm
               out_ref):   # VMEM (tb, D_out)          f32     batch tile of output
        # ---- embedding gather as a one-hot MXU matmul ------------------------
        idx = idx_ref[...]                                        # (tb, 1) int32
        iota = lax.broadcasted_iota(jnp.int32, (tb, E), 1)        # (tb, E)
        onehot = (idx == iota).astype(jnp.bfloat16)               # (tb, E) 0/1
        e = jnp.dot(onehot, table_ref[...],
                    preferred_element_type=jnp.float32)           # (tb, embed_dim) f32

        # ---- nn.Embedding max_norm renorm (PyTorch formula, f32, EUP recip) --
        sq = jnp.sum(e * e, axis=-1, keepdims=True)               # (tb, 1)
        norm = jnp.sqrt(sq)
        scale = jnp.where(norm > max_norm,
                          max_norm * pl.reciprocal(norm + 1e-7, approx=True),
                          1.0)
        e_bf = (e * scale).astype(jnp.bfloat16)                   # (tb, embed_dim)

        # ---- fused linears: x@wm + e@(wt@wm) + (bt@wm + bm), then ReLU -------
        o = jnp.dot(x_ref[...].astype(jnp.bfloat16), wm_ref[...],
                    preferred_element_type=jnp.float32)           # (tb, D_out)
        o = o + jnp.dot(e_bf, wtm_ref[...],
                        preferred_element_type=jnp.float32)
        o = o + bf_ref[...]
        out_ref[...] = jnp.maximum(o, 0.0)

    return kernel


def sample_embedding_net_forward(x, idxs, params, max_norm, *, tb=128):
    """Training-mode forward of SampleEmbeddingNet as one Pallas kernel.

    x:    (B, D)  float32
    idxs: (B,)    int32
    params: bf16 embedding table + bf16 Linear layers (see make_params).
    """
    B, D = x.shape
    table = params["embed_weight"]                   # (E, embed_dim) bf16
    E, embed_dim = table.shape
    wt = params["wt"].astype(jnp.float32)            # (embed_dim, D)
    bt = params["bt"].astype(jnp.float32)            # (1, D)
    wm = params["wm"]                                # (D, D_out) bf16
    bm = params["bm"].astype(jnp.float32)            # (1, D_out)
    D_out = wm.shape[1]

    # Lane-dense requirement (perf): pad these wrapper-side if ever violated.
    assert D % 128 == 0 and D_out % 128 == 0 and embed_dim % 128 == 0, (
        "D / D_out / embed_dim must be multiples of 128 (pad wrapper-side)")
    # VMEM-resident table budget (conservative for v7x's 64 MiB physical VMEM).
    assert E * embed_dim * table.dtype.itemsize <= 8 * 1024 * 1024, (
        "embedding table too large to pin in VMEM; use the HBM-gather fallback")

    # Algebraic fusion (in f32, cast once to bf16):
    #   (x + e@wt + bt) @ wm + bm == x@wm + e@(wt@wm) + (bt@wm + bm)
    wm_f32 = wm.astype(jnp.float32)
    wtm = (wt @ wm_f32).astype(jnp.bfloat16)               # (embed_dim, D_out)
    b_fused = (bt @ wm_f32 + bm).astype(jnp.float32)       # (1, D_out)

    n_blocks = pl.cdiv(B, tb)
    B_pad = n_blocks * tb
    if B_pad != B:
        x = jnp.pad(x, ((0, B_pad - B), (0, 0)))
        idxs = jnp.pad(idxs, (0, B_pad - B))
    x = x.astype(jnp.float32)
    idxs2 = idxs.astype(jnp.int32).reshape(B_pad, 1)

    kernel = _make_kernel(tb, E, float(max_norm))

    grid_spec = pltpu.PrefetchScalarGridSpec(
        num_scalar_prefetch=0,
        grid=(n_blocks,),
        in_specs=[
            pl.BlockSpec((tb, 1), lambda i: (i, 0)),             # idxs batch tile
            pl.BlockSpec((E, embed_dim), lambda i: (0, 0)),      # table (pinned)
            pl.BlockSpec((embed_dim, D_out), lambda i: (0, 0)),  # wtm   (pinned)
            pl.BlockSpec((D, D_out), lambda i: (0, 0)),          # wm    (pinned)
            pl.BlockSpec((tb, D), lambda i: (i, 0)),             # x batch tile
            pl.BlockSpec((1, D_out), lambda i: (0, 0)),          # fused bias
        ],
        out_specs=pl.BlockSpec((tb, D_out), lambda i: (i, 0)),
    )

    out = pl.pallas_call(
        kernel,
        out_shape=jax.ShapeDtypeStruct((B_pad, D_out), jnp.float32),
        grid_spec=grid_spec,
        compiler_params=pltpu.CompilerParams(
            dimension_semantics=("parallel",),   # v7x: shard batch over 2 TCs
        ),
    )(idxs2, table, wtm, wm, x, b_fused)
    return out[:B]


def make_params(key, E, embed_dim, D, D_out, dtype=jnp.bfloat16):
    k1, k2, k3, k4, k5 = jax.random.split(key, 5)
    return {
        # nn.Embedding weight ~ N(0,1) in PyTorch
        "embed_weight": jax.random.normal(k1, (E, embed_dim), jnp.float32).astype(dtype),
        # embed_transform: Linear(embed_dim -> D)
        "wt": (jax.random.normal(k2, (embed_dim, D), jnp.float32)
               / (embed_dim ** 0.5)).astype(dtype),
        "bt": (jax.random.normal(k3, (1, D), jnp.float32) * 0.01).astype(dtype),
        # main_net: Linear(D -> D_out) (+ ReLU in kernel)
        "wm": (jax.random.normal(k4, (D, D_out), jnp.float32)
               / (D ** 0.5)).astype(dtype),
        "bm": (jax.random.normal(k5, (1, D_out), jnp.float32) * 0.01).astype(dtype),
    }


if __name__ == "__main__":
    B, E, embed_dim, D, D_out = 200, 512, 128, 256, 256
    max_norm = 1.0

    key = jax.random.PRNGKey(0)
    kx, ki, kp = jax.random.split(key, 3)

    x = jax.random.normal(kx, (B, D), jnp.float32)
    idxs = jax.random.randint(ki, (B,), 0, E, jnp.int32)
    params = make_params(kp, E, embed_dim, D, D_out)

    fwd = jax.jit(functools.partial(sample_embedding_net_forward,
                                    max_norm=max_norm))
    out = fwd(x, idxs, params)
    out = jax.block_until_ready(out)

    # pure-JAX f32 reference (unfused) using the same bf16-quantized parameters
    tab = params["embed_weight"].astype(jnp.float32)
    wt = params["wt"].astype(jnp.float32)
    bt = params["bt"].astype(jnp.float32)
    wm = params["wm"].astype(jnp.float32)
    bm = params["bm"].astype(jnp.float32)

    emb = tab[idxs]
    nrm = jnp.linalg.norm(emb, axis=-1, keepdims=True)
    emb = emb * jnp.where(nrm > max_norm, max_norm / (nrm + 1e-7), 1.0)
    t = emb @ wt + bt
    ref = jnp.maximum((x + t) @ wm + bm, 0.0)

    assert out.shape == ref.shape
    max_err = float(jnp.max(jnp.abs(out - ref)))
    assert jnp.allclose(out, ref, atol=3e-2, rtol=3e-2), (
        f"mismatch vs reference (max abs err={max_err})")

    print("KERNEL_OK")
</pallas_src>

<mosaic_0001>
module attributes {stable_mosaic.version = 11 : i64} {
  func.func @kernel(%arg0: i32, %arg1: memref<128x1xi32, #tpu.memory_space<vmem>>, %arg2: memref<512x128xbf16, #tpu.memory_space<vmem>>, %arg3: memref<128x256xbf16, #tpu.memory_space<vmem>>, %arg4: memref<256x256xbf16, #tpu.memory_space<vmem>>, %arg5: memref<128x256xf32, #tpu.memory_space<vmem>>, %arg6: memref<1x256xf32, #tpu.memory_space<vmem>>, %arg7: memref<128x256xf32, #tpu.memory_space<vmem>>) attributes {dimension_semantics = [#tpu.dimension_semantics<parallel>], iteration_bounds = array<i64: 2>, scalar_prefetch = 0 : i64, scratch_operands = 0 : i64, tpu.core_type = #tpu.core_type<tc>, window_params = [{transform_indices = @transform_0, window_bounds = array<i64: 128, 1>}, {pipeline_mode = #tpu.pipeline_mode<synchronous>, transform_indices = @transform_1, window_bounds = array<i64: 512, 128>}, {pipeline_mode = #tpu.pipeline_mode<synchronous>, transform_indices = @transform_2, window_bounds = array<i64: 128, 256>}, {pipeline_mode = #tpu.pipeline_mode<synchronous>, transform_indices = @transform_3, window_bounds = array<i64: 256, 256>}, {transform_indices = @transform_4, window_bounds = array<i64: 128, 256>}, {pipeline_mode = #tpu.pipeline_mode<synchronous>, transform_indices = @transform_5, window_bounds = array<i64: 1, 256>}, {transform_indices = @transform_6, window_bounds = array<i64: 128, 256>}]} {
    %c0 = arith.constant 0 : index
    %c0_0 = arith.constant 0 : index
    %0 = vector.load %arg1[%c0, %c0_0] : memref<128x1xi32, #tpu.memory_space<vmem>>, vector<128x1xi32>
    %1 = tpu.iota {dimensions = array<i32: 1>} : vector<128x512xi32>
    %2 = vector.broadcast %0 : vector<128x1xi32> to vector<128x512xi32>
    %3 = arith.cmpi eq, %2, %1 : vector<128x512xi32>
    %4 = arith.extui %3 : vector<128x512xi1> to vector<128x512xi32>
    %5 = arith.sitofp %4 : vector<128x512xi32> to vector<128x512xf32>
    %6 = arith.truncf %5 : vector<128x512xf32> to vector<128x512xbf16>
    %c0_1 = arith.constant 0 : index
    %c0_2 = arith.constant 0 : index
    %7 = vector.load %arg2[%c0_1, %c0_2] : memref<512x128xbf16, #tpu.memory_space<vmem>>, vector<512x128xbf16>
    %cst = arith.constant dense<0.000000e+00> : vector<128x128xf32>
    %8 = tpu.matmul %6, %7, %cst {dimension_numbers = #tpu.dot_dimension_numbers<[1], [0], [0], [1], [0, 0, 1, 1], [], []>} : vector<128x512xbf16>, vector<512x128xbf16>, vector<128x128xf32> -> vector<128x128xf32>
    %9 = arith.mulf %8, %8 : vector<128x128xf32>
    %cst_3 = arith.constant dense<0.000000e+00> : vector<128xf32>
    %10 = vector.multi_reduction <add>, %9, %cst_3 [1] : vector<128x128xf32> to vector<128xf32>
    %11 = vector.shape_cast %10 : vector<128xf32> to vector<128x1xf32>
    %12 = math.sqrt %11 : vector<128x1xf32>
    %cst_4 = arith.constant 1.000000e+00 : f32
    %13 = vector.broadcast %cst_4 : f32 to vector<128x1xf32>
    %14 = arith.cmpf ogt, %12, %13 : vector<128x1xf32>
    %cst_5 = arith.constant 1.000000e-07 : f32
    %15 = vector.broadcast %cst_5 : f32 to vector<128x1xf32>
    %16 = arith.addf %12, %15 : vector<128x1xf32>
    %17 = tpu.reciprocal %16 {approx = true} : vector<128x1xf32> -> vector<128x1xf32>
    %cst_6 = arith.constant 1.000000e+00 : f32
    %18 = vector.broadcast %cst_6 : f32 to vector<128x1xf32>
    %19 = arith.mulf %18, %17 : vector<128x1xf32>
    %cst_7 = arith.constant 1.000000e+00 : f32
    %20 = vector.broadcast %cst_7 : f32 to vector<128x1xf32>
    %21 = arith.select %14, %19, %20 : vector<128x1xi1>, vector<128x1xf32>
    %22 = vector.broadcast %21 : vector<128x1xf32> to vector<128x128xf32>
    %23 = arith.mulf %8, %22 : vector<128x128xf32>
    %24 = arith.truncf %23 : vector<128x128xf32> to vector<128x128xbf16>
    %c0_8 = arith.constant 0 : index
    %c0_9 = arith.constant 0 : index
    %25 = vector.load %arg5[%c0_8, %c0_9] : memref<128x256xf32, #tpu.memory_space<vmem>>, vector<128x256xf32>
    %26 = arith.truncf %25 : vector<128x256xf32> to vector<128x256xbf16>
    %c0_10 = arith.constant 0 : index
    %c0_11 = arith.constant 0 : index
    %27 = vector.load %arg4[%c0_10, %c0_11] : memref<256x256xbf16, #tpu.memory_space<vmem>>, vector<256x256xbf16>
    %cst_12 = arith.constant dense<0.000000e+00> : vector<128x256xf32>
    %28 = tpu.matmul %26, %27, %cst_12 {dimension_numbers = #tpu.dot_dimension_numbers<[1], [0], [0], [1], [0, 0, 1, 1], [], []>} : vector<128x256xbf16>, vector<256x256xbf16>, vector<128x256xf32> -> vector<128x256xf32>
    %c0_13 = arith.constant 0 : index
    %c0_14 = arith.constant 0 : index
    %29 = vector.load %arg3[%c0_13, %c0_14] : memref<128x256xbf16, #tpu.memory_space<vmem>>, vector<128x256xbf16>
    %cst_15 = arith.constant dense<0.000000e+00> : vector<128x256xf32>
    %30 = tpu.matmul %24, %29, %cst_15 {dimension_numbers = #tpu.dot_dimension_numbers<[1], [0], [0], [1], [0, 0, 1, 1], [], []>} : vector<128x128xbf16>, vector<128x256xbf16>, vector<128x256xf32> -> vector<128x256xf32>
    %31 = arith.addf %28, %30 : vector<128x256xf32>
    %c0_16 = arith.constant 0 : index
    %c0_17 = arith.constant 0 : index
    %32 = vector.load %arg6[%c0_16, %c0_17] : memref<1x256xf32, #tpu.memory_space<vmem>>, vector<1x256xf32>
    %33 = vector.broadcast %32 : vector<1x256xf32> to vector<128x256xf32>
    %34 = arith.addf %31, %33 : vector<128x256xf32>
    %cst_18 = arith.constant 0.000000e+00 : f32
    %35 = vector.broadcast %cst_18 : f32 to vector<128x256xf32>
    %36 = arith.maximumf %34, %35 : vector<128x256xf32>
    %c0_19 = arith.constant 0 : index
    %c0_20 = arith.constant 0 : index
    %37 = vector.load %arg7[%c0_19, %c0_20] : memref<128x256xf32, #tpu.memory_space<vmem>>, vector<128x256xf32>
    tpu.vector_store %arg7[%c0_19, %c0_20], %36 {strides = array<i32>} : memref<128x256xf32, #tpu.memory_space<vmem>>, vector<128x256xf32>,
    return
  }
  func.func @transform_0(%arg0: i32) -> (i32, i32) {
    %c0_i32 = arith.constant 0 : i32
    %c0_i32_0 = arith.constant 0 : i32
    return %arg0, %c0_i32 : i32, i32
  }
  func.func @transform_1(%arg0: i32) -> (i32, i32) {
    %c0_i32 = arith.constant 0 : i32
    %c0_i32_0 = arith.constant 0 : i32
    %c0_i32_1 = arith.constant 0 : i32
    return %c0_i32, %c0_i32_0 : i32, i32
  }
  func.func @transform_2(%arg0: i32) -> (i32, i32) {
    %c0_i32 = arith.constant 0 : i32
    %c0_i32_0 = arith.constant 0 : i32
    %c0_i32_1 = arith.constant 0 : i32
    return %c0_i32, %c0_i32_0 : i32, i32
  }
  func.func @transform_3(%arg0: i32) -> (i32, i32) {
    %c0_i32 = arith.constant 0 : i32
    %c0_i32_0 = arith.constant 0 : i32
    %c0_i32_1 = arith.constant 0 : i32
    return %c0_i32, %c0_i32_0 : i32, i32
  }
  func.func @transform_4(%arg0: i32) -> (i32, i32) {
    %c0_i32 = arith.constant 0 : i32
    %c0_i32_0 = arith.constant 0 : i32
    return %arg0, %c0_i32 : i32, i32
  }
  func.func @transform_5(%arg0: i32) -> (i32, i32) {
    %c0_i32 = arith.constant 0 : i32
    %c0_i32_0 = arith.constant 0 : i32
    %c0_i32_1 = arith.constant 0 : i32
    return %c0_i32, %c0_i32_0 : i32, i32
  }
  func.func @transform_6(%arg0: i32) -> (i32, i32) {
    %c0_i32 = arith.constant 0 : i32
    %c0_i32_0 = arith.constant 0 : i32
    return %arg0, %c0_i32 : i32, i32
  }
}

</mosaic_0001>

<llo_original>
// kernel: sample_embedding_net_forward.1
$region0: #{sample_embedding_net_forward.1}
  #allocation0 [shape = 'u32[]', space=smem, size = 0x4, offset = 0x4, fixed_abs, tag = 'smem constant byte address 0x4 - core index']
  #allocation1 [shape = 'u32[72,128]{1,0:T(1,128)}', space=vmem, size = 0x9000, scoped, tag = 'internal scratch']
  %s0 = inlined_call_operand.vmem [shape: s32[256,1], index: 0, kind: input, shape index: {}]
  %s1 = inlined_call_operand.vmem [shape: bf16[512,128], index: 1, kind: input, shape index: {}]
  %s2 = inlined_call_operand.vmem [shape: bf16[128,256], index: 2, kind: input, shape index: {}]
  %s3 = inlined_call_operand.vmem [shape: bf16[256,256], index: 3, kind: input, shape index: {}]
  %s4 = inlined_call_operand.vmem [shape: f32[256,256], index: 4, kind: input, shape index: {}]
  %s5 = inlined_call_operand.vmem [shape: f32[1,256], index: 5, kind: input, shape index: {}]
  %s6 = inlined_call_operand.vmem [shape: f32[256,256], index: 6, kind: output, shape index: {}]
  %s7 = sld [smem:[#allocation0]]
  $region57: #{sample_embedding_net_forward.1} parent=0
    _
  %s9 = ssub.s32 1, %s7
  %s10 = scalar_select 0, %s9, %s7
  loop: start=0, step=1, limit=4
  $region2: #{sample_embedding_net_forward.1} parent=0 // loop_pre_header
    _
  $region3: #{sample_embedding_net_forward.1} parent=0 // loop_header
    %s12 = sphi 0, %s16
    %p13 = scmp.ge.s32.totalorder %s12, 4
    %s22 = sphi 0, %s24
    %s25 = sphi 0, %s22
    %s26 = sphi 0, %s25
    %s42 = sphi 0, %s26
    %s46 = sphi 0, %s46
    %s48 = sphi 0, %s46
    %s49 = sphi 0, %s48
    %s63 = sphi 0, %s49
    %s67 = sphi 0, %s67
    %s69 = sphi 0, %s67
    %s70 = sphi 0, %s69
    %s84 = sphi 0, %s70
    %s88 = sphi 0, %s88
    %s90 = sphi 0, %s88
    %s91 = sphi 0, %s90
    %s105 = sphi 0, %s91
    %s111 = sphi 0, %s113
    %s114 = sphi 0, %s111
    %s115 = sphi 0, %s114
    %s131 = sphi 0, %s115
    %s135 = sphi 0, %s135
    %s137 = sphi 0, %s135
    %s138 = sphi 0, %s137
    %s152 = sphi 0, %s138
    %s158 = sphi 0, %s160
    %s161 = sphi 0, %s158
    %s162 = sphi 0, %s161
    %s178 = sphi 0, %s162
  $region4: #{sample_embedding_net_forward.1} parent=0 // loop_header_branch
    %15 = sbr.rel (%p13) target = $region8
  $region5: #{sample_embedding_net_forward.1} parent=0 // loop_body
    %s17 = ssub.s32 %s12, 1
    %s18 = ssub.s32 %s12, 2
    %s19 = sadd.s32 %s12, 1
    %s20 = ssub.s32 %s12, %s19
    %p21 = scmp.eq.s32.totalorder %s20, 0
    %s23 = sadd.s32 %s22, 1
    %s24 = scalar_select %p21, %s22, %s23
    %p27 = pneg %p21
    %p28 = scmp.eq.s32.totalorder %s12, 1
    %p29 = por %p27, %p28
    %p30 = scmp.ne.s32.totalorder %s22, %s25
    %p31 = scmp.eq.s32.totalorder %s12, 0
    %p32 = por %p30, %p31
    %p33 = scmp.ne.s32.totalorder %s22, %s25
    %p34 = scmp.eq.s32.totalorder %s17, 1
    %p35 = por %p33, %p34
    %p36 = scmp.ne.s32.totalorder %s25, %s26
    %p37 = scmp.eq.s32.totalorder %s17, 0
    %p38 = por %p36, %p37
    %p39 = scmp.ne.s32.totalorder %s25, %s26
    %p40 = scmp.eq.s32.totalorder %s18, 1
    %p41 = por %p39, %p40
    %p43 = scmp.ne.s32.totalorder %s26, %s42
    %p44 = scmp.eq.s32.totalorder %s18, 0
    %p45 = por %p43, %p44
    %s47 = sadd.s32 %s46, 1
    %p50 = scmp.eq.s32.totalorder %s12, 1
    %p51 = scmp.ne.s32.totalorder %s46, %s48
    %p52 = scmp.eq.s32.totalorder %s12, 0
    %p53 = por %p51, %p52
    %p54 = scmp.ne.s32.totalorder %s46, %s48
    %p55 = scmp.eq.s32.totalorder %s17, 1
    %p56 = por %p54, %p55
    %p57 = scmp.ne.s32.totalorder %s48, %s49
    %p58 = scmp.eq.s32.totalorder %s17, 0
    %p59 = por %p57, %p58
    %p60 = scmp.ne.s32.totalorder %s48, %s49
    %p61 = scmp.eq.s32.totalorder %s18, 1
    %p62 = por %p60, %p61
    %p64 = scmp.ne.s32.totalorder %s49, %s63
    %p65 = scmp.eq.s32.totalorder %s18, 0
    %p66 = por %p64, %p65
    %s68 = sadd.s32 %s67, 1
    %p71 = scmp.eq.s32.totalorder %s12, 1
    %p72 = scmp.ne.s32.totalorder %s67, %s69
    %p73 = scmp.eq.s32.totalorder %s12, 0
    %p74 = por %p72, %p73
    %p75 = scmp.ne.s32.totalorder %s67, %s69
    %p76 = scmp.eq.s32.totalorder %s17, 1
    %p77 = por %p75, %p76
    %p78 = scmp.ne.s32.totalorder %s69, %s70
    %p79 = scmp.eq.s32.totalorder %s17, 0
    %p80 = por %p78, %p79
    %p81 = scmp.ne.s32.totalorder %s69, %s70
    %p82 = scmp.eq.s32.totalorder %s18, 1
    %p83 = por %p81, %p82
    %p85 = scmp.ne.s32.totalorder %s70, %s84
    %p86 = scmp.eq.s32.totalorder %s18, 0
    %p87 = por %p85, %p86
    %s89 = sadd.s32 %s88, 1
    %p92 = scmp.eq.s32.totalorder %s12, 1
    %p93 = scmp.ne.s32.totalorder %s88, %s90
    %p94 = scmp.eq.s32.totalorder %s12, 0
    %p95 = por %p93, %p94
    %p96 = scmp.ne.s32.totalorder %s88, %s90
    %p97 = scmp.eq.s32.totalorder %s17, 1
    %p98 = por %p96, %p97
    %p99 = scmp.ne.s32.totalorder %s90, %s91
    %p100 = scmp.eq.s32.totalorder %s17, 0
    %p101 = por %p99, %p100
    %p102 = scmp.ne.s32.totalorder %s90, %s91
    %p103 = scmp.eq.s32.totalorder %s18, 1
    %p104 = por %p102, %p103
    %p106 = scmp.ne.s32.totalorder %s91, %s105
    %p107 = scmp.eq.s32.totalorder %s18, 0
    %p108 = por %p106, %p107
    %s109 = ssub.s32 %s12, %s19
    %p110 = scmp.eq.s32.totalorder %s109, 0
    %s112 = sadd.s32 %s111, 1
    %s113 = scalar_select %p110, %s111, %s112
    %p116 = pneg %p110
    %p117 = scmp.eq.s32.totalorder %s12, 1
    %p118 = por %p116, %p117
    %p119 = scmp.ne.s32.totalorder %s111, %s114
    %p120 = scmp.eq.s32.totalorder %s12, 0
    %p121 = por %p119, %p120
    %p122 = scmp.ne.s32.totalorder %s111, %s114
    %p123 = scmp.eq.s32.totalorder %s17, 1
    %p124 = por %p122, %p123
    %p125 = scmp.ne.s32.totalorder %s114, %s115
    %p126 = scmp.eq.s32.totalorder %s17, 0
    %p127 = por %p125, %p126
    %p128 = scmp.ne.s32.totalorder %s114, %s115
    %p129 = scmp.eq.s32.totalorder %s18, 1
    %p130 = por %p128, %p129
    %p132 = scmp.ne.s32.totalorder %s115, %s131
    %p133 = scmp.eq.s32.totalorder %s18, 0
    %p134 = por %p132, %p133
    %s136 = sadd.s32 %s135, 1
    %p139 = scmp.eq.s32.totalorder %s12, 1
    %p140 = scmp.ne.s32.totalorder %s135, %s137
    %p141 = scmp.eq.s32.totalorder %s12, 0
    %p142 = por %p140, %p141
    %p143 = scmp.ne.s32.totalorder %s135, %s137
    %p144 = scmp.eq.s32.totalorder %s17, 1
    %p145 = por %p143, %p144
    %p146 = scmp.ne.s32.totalorder %s137, %s138
    %p147 = scmp.eq.s32.totalorder %s17, 0
    %p148 = por %p146, %p147
    %p149 = scmp.ne.s32.totalorder %s137, %s138
    %p150 = scmp.eq.s32.totalorder %s18, 1
    %p151 = por %p149, %p150
    %p153 = scmp.ne.s32.totalorder %s138, %s152
    %p154 = scmp.eq.s32.totalorder %s18, 0
    %p155 = por %p153, %p154
    %s156 = ssub.s32 %s12, %s19
    %p157 = scmp.eq.s32.totalorder %s156, 0
    %s159 = sadd.s32 %s158, 1
    %s160 = scalar_select %p157, %s158, %s159
    %p163 = pneg %p157
    %p164 = scmp.eq.s32.totalorder %s12, 1
    %p165 = por %p163, %p164
    %p166 = scmp.ne.s32.totalorder %s158, %s161
    %p167 = scmp.eq.s32.totalorder %s12, 0
    %p168 = por %p166, %p167
    %p169 = scmp.ne.s32.totalorder %s158, %s161
    %p170 = scmp.eq.s32.totalorder %s17, 1
    %p171 = por %p169, %p170
    %p172 = scmp.ne.s32.totalorder %s161, %s162
    %p173 = scmp.eq.s32.totalorder %s17, 0
    %p174 = por %p172, %p173
    %p175 = scmp.ne.s32.totalorder %s161, %s162
    %p176 = scmp.eq.s32.totalorder %s18, 1
    %p177 = por %p175, %p176
    %p179 = scmp.ne.s32.totalorder %s162, %s178
    %p180 = scmp.eq.s32.totalorder %s18, 0
    %p181 = por %p179, %p180
    %p182 = scmp.le.s32.totalorder 1, %s12
    %p183 = scmp.lt.s32.totalorder %s12, 3
    %p184 = pnand %p182, %p183
    %p185 = pneg %p184
    // Predicated region
    $region9: #{sample_embedding_net_forward.1} parent=5 // pred_check
      _
    $region10: #{sample_embedding_net_forward.1} parent=5 // pred_check_branch
      %187 = sbr.rel (%p184) target = $region12
    $region11: #{sample_embedding_net_forward.1} parent=5 // pred_region
      %s188 = ssub.s32 %s12, 1
      // Predicated region
      $region13: #{sample_embedding_net_forward.1} parent=11 // pred_check
        %p189 = pneg %p59
      $region14: #{sample_embedding_net_forward.1} parent=11 // pred_check_branch
        %191 = sbr.rel (%p189) target = $region16
      $region15: #{sample_embedding_net_forward.1} parent=11 // pred_region
        _
      $region16: #{sample_embedding_net_forward.1} parent=11 // pred_fallthru
        _
      // Predicated region
      $region17: #{sample_embedding_net_forward.1} parent=11 // pred_check
        %p192 = pneg %p80
      $region18: #{sample_embedding_net_forward.1} parent=11 // pred_check_branch
        %194 = sbr.rel (%p192) target = $region20
      $region19: #{sample_embedding_net_forward.1} parent=11 // pred_region
        _
      $region20: #{sample_embedding_net_forward.1} parent=11 // pred_fallthru
        _
      // Predicated region
      $region21: #{sample_embedding_net_forward.1} parent=11 // pred_check
        %p195 = pneg %p101
      $region22: #{sample_embedding_net_forward.1} parent=11 // pred_check_branch
        %197 = sbr.rel (%p195) target = $region24
      $region23: #{sample_embedding_net_forward.1} parent=11 // pred_region
        _
      $region24: #{sample_embedding_net_forward.1} parent=11 // pred_fallthru
        _
      // Predicated region
      $region25: #{sample_embedding_net_forward.1} parent=11 // pred_check
        %p198 = pneg %p148
      $region26: #{sample_embedding_net_forward.1} parent=11 // pred_check_branch
        %200 = sbr.rel (%p198) target = $region28
      $region27: #{sample_embedding_net_forward.1} parent=11 // pred_region
        _
      $region28: #{sample_embedding_net_forward.1} parent=11 // pred_fallthru
        _
    $region12: #{sample_embedding_net_forward.1} parent=5 // pred_fallthru
      _
    %p201 = scmp.lt.s32.totalorder %s12, 2
    // Predicated region
    $region29: #{sample_embedding_net_forward.1} parent=5 // pred_check
      %p202 = pneg %p201
    $region30: #{sample_embedding_net_forward.1} parent=5 // pred_check_branch
      %204 = sbr.rel (%p202) target = $region32
    $region31: #{sample_embedding_net_forward.1} parent=5 // pred_region
      // Predicated region
      $region33: #{sample_embedding_net_forward.1} parent=31 // pred_check
        %p205 = pneg %p32
      $region34: #{sample_embedding_net_forward.1} parent=31 // pred_check_branch
        %207 = sbr.rel (%p205) target = $region36
      $region35: #{sample_embedding_net_forward.1} parent=31 // pred_region
        %s208 = smul.u32 16, %s12
        %p209 = scmp.lt.s32.totalorder %s208, 31
        %s210 = scalar_select %p209, %s208, 31
        %s211 = smul.addr %s210, 8
        %s212 = scalar_lea.vmem %s0, %s211
        %s213 = smul.u32 16, %s12
      $region36: #{sample_embedding_net_forward.1} parent=31 // pred_fallthru
        _
      // Predicated region
      $region37: #{sample_embedding_net_forward.1} parent=31 // pred_check
        %p214 = pneg %p121
      $region38: #{sample_embedding_net_forward.1} parent=31 // pred_check_branch
        %216 = sbr.rel (%p214) target = $region40
      $region39: #{sample_embedding_net_forward.1} parent=31 // pred_region
        %s217 = smul.u32 16, %s12
        %p218 = scmp.lt.s32.totalorder %s217, 31
        %s219 = scalar_select %p218, %s217, 31
        %s220 = smul.addr %s219, 2
        %s221 = smul.addr %s220, 8
        %s222 = scalar_lea.vmem %s4, %s221
        %s223 = smul.u32 16, %s12
      $region40: #{sample_embedding_net_forward.1} parent=31 // pred_fallthru
        _
    $region32: #{sample_embedding_net_forward.1} parent=5 // pred_fallthru
      _
    %p224 = scmp.le.s32.totalorder 1, %s12
    %p225 = scmp.lt.s32.totalorder %s12, 3
    %p226 = pnand %p224, %p225
    %p227 = pneg %p226
    // Predicated region
    $region41: #{sample_embedding_net_forward.1} parent=5 // pred_check
      _
    $region42: #{sample_embedding_net_forward.1} parent=5 // pred_check_branch
      %229 = sbr.rel (%p226) target = $region44
    $region43: #{sample_embedding_net_forward.1} parent=5 // pred_region
      %s230 = ssub.s32 %s12, 1
      %s231 = smul.u32 16, %s17
      %p232 = scmp.lt.s32.totalorder %s231, 31
      %s233 = scalar_select %p232, %s231, 31
      %s234 = smul.addr %s233, 8
      %s235 = scalar_lea.vmem %s0, %s234
      %p236 = pneg %p38
      %p237 = pneg %p35
      %p238 = pneg %p59
      %p239 = pneg %p56
      %p240 = pneg %p80
      %p241 = pneg %p77
      %p242 = pneg %p101
      %p243 = pneg %p98
      %s244 = smul.u32 16, %s17
      %p245 = scmp.lt.s32.totalorder %s244, 31
      %s246 = scalar_select %p245, %s244, 31
      %s247 = smul.addr %s246, 2
      %s248 = smul.addr %s247, 8
      %s249 = scalar_lea.vmem %s4, %s248
      %p250 = pneg %p127
      %p251 = pneg %p124
      %p252 = pneg %p148
      %p253 = pneg %p145
      %p254 = pneg %p174
      %p255 = pneg %p171
      %s256 = smul.u32 16, %s17
      %p257 = scmp.lt.s32.totalorder %s256, 31
      %s258 = scalar_select %p257, %s256, 31
      %s259 = smul.addr %s258, 2
      %s260 = smul.addr %s259, 8
      %s261 = scalar_lea.vmem %s6, %s260
      %s262 = smul.u32 16, %s17
      %p263 = scmp.lt.s32.totalorder %s262, 31
      %s264 = scalar_select %p263, %s262, 31
      %s265 = smul.addr %s264, 8
      %s266 = scalar_lea.vmem %s0, %s265
      %s267 = smul.u32 16, %s17
      %s268 = smul.u32 16, %s17
      %p269 = scmp.lt.s32.totalorder %s268, 31
      %s270 = scalar_select %p269, %s268, 31
      %s271 = smul.addr %s270, 2
      %s272 = smul.addr %s271, 8
      %s273 = scalar_lea.vmem %s4, %s272
      %s274 = smul.u32 16, %s17
      %s275 = smul.u32 16, %s17
      %p276 = scmp.lt.s32.totalorder %s275, 31
      %s277 = scalar_select %p276, %s275, 31
      %s278 = smul.addr %s277, 2
      %s279 = smul.addr %s278, 8
      %s280 = scalar_lea.vmem %s6, %s279
      %s281 = smul.u32 16, %s17
      %v282 = vld [vmem:[%s266] sm:$0xff]
      %v283 = vld [vmem:[%s266 + $0x8] sm:$0xff]
      %v284 = vld [vmem:[%s266 + $0x10] sm:$0xff]
      %v285 = vld [vmem:[%s266 + $0x18] sm:$0xff]
      %v286 = vld [vmem:[%s266 + $0x20] sm:$0xff]
      %v287 = vld [vmem:[%s266 + $0x28] sm:$0xff]
      %v288 = vld [vmem:[%s266 + $0x30] sm:$0xff]
      %v289 = vld [vmem:[%s266 + $0x38] sm:$0xff]
      %v290 = vld [vmem:[%s266 + $0x40] sm:$0xff]
      %v291 = vld [vmem:[%s266 + $0x48] sm:$0xff]
      %v292 = vld [vmem:[%s266 + $0x50] sm:$0xff]
      %v293 = vld [vmem:[%s266 + $0x58] sm:$0xff]
      %v294 = vld [vmem:[%s266 + $0x60] sm:$0xff]
      %v295 = vld [vmem:[%s266 + $0x68] sm:$0xff]
      %v296 = vld [vmem:[%s266 + $0x70] sm:$0xff]
      %v297 = vld [vmem:[%s266 + $0x78] sm:$0xff]
      %v298 = vlaneseq
      %v299 = vand.u32 %v298, 127
      %v300 = vadd.s32 %v299, 128
      %v301 = vadd.s32 %v299, 256
      %v302 = vadd.s32 %v299, 384
      %303 = vset.pattern.permute.xlu0 0
      %304 = vperm.xlu0 %303, %v282
      %v305 = vpop.permute.xlu0 %304
      %306 = vset.pattern.permute.xlu0 0
      %307 = vperm.xlu0 %306, %v283
      %v308 = vpop.permute.xlu0 %307
      %309 = vset.pattern.permute.xlu0 0
      %310 = vperm.xlu0 %309, %v284
      %v311 = vpop.permute.xlu0 %310
      %312 = vset.pattern.permute.xlu0 0
      %313 = vperm.xlu0 %312, %v285
      %v314 = vpop.permute.xlu0 %313
      %315 = vset.pattern.permute.xlu0 0
      %316 = vperm.xlu0 %315, %v286
      %v317 = vpop.permute.xlu0 %316
      %318 = vset.pattern.permute.xlu0 0
      %319 = vperm.xlu0 %318, %v287
      %v320 = vpop.permute.xlu0 %319
      %321 = vset.pattern.permute.xlu0 0
      %322 = vperm.xlu0 %321, %v288
      %v323 = vpop.permute.xlu0 %322
      %324 = vset.pattern.permute.xlu0 0
      %325 = vperm.xlu0 %324, %v289
      %v326 = vpop.permute.xlu0 %325
      %327 = vset.pattern.permute.xlu0 0
      %328 = vperm.xlu0 %327, %v290
      %v329 = vpop.permute.xlu0 %328
      %330 = vset.pattern.permute.xlu0 0
      %331 = vperm.xlu0 %330, %v291
      %v332 = vpop.permute.xlu0 %331
      %333 = vset.pattern.permute.xlu0 0
      %334 = vperm.xlu0 %333, %v292
      %v335 = vpop.permute.xlu0 %334
      %336 = vset.pattern.permute.xlu0 0
      %337 = vperm.xlu0 %336, %v293
      %v338 = vpop.permute.xlu0 %337
      %339 = vset.pattern.permute.xlu0 0
      %340 = vperm.xlu0 %339, %v294
      %v341 = vpop.permute.xlu0 %340
      %342 = vset.pattern.permute.xlu0 0
      %343 = vperm.xlu0 %342, %v295
      %v344 = vpop.permute.xlu0 %343
      %345 = vset.pattern.permute.xlu0 0
      %346 = vperm.xlu0 %345, %v296
      %v347 = vpop.permute.xlu0 %346
      %348 = vset.pattern.permute.xlu0 0
      %349 = vperm.xlu0 %348, %v297
      %v350 = vpop.permute.xlu0 %349
      %vm351 = vcmp.eq.s32.totalorder %v305, %v299
      %vm352 = vcmp.eq.s32.totalorder %v305, %v300
      %vm353 = vcmp.eq.s32.totalorder %v305, %v301
      %vm354 = vcmp.eq.s32.totalorder %v305, %v302
      %vm355 = vcmp.eq.s32.totalorder %v308, %v299
      %vm356 = vcmp.eq.s32.totalorder %v308, %v300
      %vm357 = vcmp.eq.s32.totalorder %v308, %v301
      %vm358 = vcmp.eq.s32.totalorder %v308, %v302
      %vm359 = vcmp.eq.s32.totalorder %v311, %v299
      %vm360 = vcmp.eq.s32.totalorder %v311, %v300
      %vm361 = vcmp.eq.s32.totalorder %v311, %v301
      %vm362 = vcmp.eq.s32.totalorder %v311, %v302
      %vm363 = vcmp.eq.s32.totalorder %v314, %v299
      %vm364 = vcmp.eq.s32.totalorder %v314, %v300
      %vm365 = vcmp.eq.s32.totalorder %v314, %v301
      %vm366 = vcmp.eq.s32.totalorder %v314, %v302
      %vm367 = vcmp.eq.s32.totalorder %v317, %v299
      %vm368 = vcmp.eq.s32.totalorder %v317, %v300
      %vm369 = vcmp.eq.s32.totalorder %v317, %v301
      %vm370 = vcmp.eq.s32.totalorder %v317, %v302
      %vm371 = vcmp.eq.s32.totalorder %v320, %v299
      %vm372 = vcmp.eq.s32.totalorder %v320, %v300
      %vm373 = vcmp.eq.s32.totalorder %v320, %v301
      %vm374 = vcmp.eq.s32.totalorder %v320, %v302
      %vm375 = vcmp.eq.s32.totalorder %v323, %v299
      %vm376 = vcmp.eq.s32.totalorder %v323, %v300
      %vm377 = vcmp.eq.s32.totalorder %v323, %v301
      %vm378 = vcmp.eq.s32.totalorder %v323, %v302
      %vm379 = vcmp.eq.s32.totalorder %v326, %v299
      %vm380 = vcmp.eq.s32.totalorder %v326, %v300
      %vm381 = vcmp.eq.s32.totalorder %v326, %v301
      %vm382 = vcmp.eq.s32.totalorder %v326, %v302
      %vm383 = vcmp.eq.s32.totalorder %v329, %v299
      %vm384 = vcmp.eq.s32.totalorder %v329, %v300
      %vm385 = vcmp.eq.s32.totalorder %v329, %v301
      %vm386 = vcmp.eq.s32.totalorder %v329, %v302
      %vm387 = vcmp.eq.s32.totalorder %v332, %v299
      %vm388 = vcmp.eq.s32.totalorder %v332, %v300
      %vm389 = vcmp.eq.s32.totalorder %v332, %v301
      %vm390 = vcmp.eq.s32.totalorder %v332, %v302
      %vm391 = vcmp.eq.s32.totalorder %v335, %v299
      %vm392 = vcmp.eq.s32.totalorder %v335, %v300
      %vm393 = vcmp.eq.s32.totalorder %v335, %v301
      %vm394 = vcmp.eq.s32.totalorder %v335, %v302
      %vm395 = vcmp.eq.s32.totalorder %v338, %v299
      %vm396 = vcmp.eq.s32.totalorder %v338, %v300
      %vm397 = vcmp.eq.s32.totalorder %v338, %v301
      %vm398 = vcmp.eq.s32.totalorder %v338, %v302
      %vm399 = vcmp.eq.s32.totalorder %v341, %v299
      %vm400 = vcmp.eq.s32.totalorder %v341, %v300
      %vm401 = vcmp.eq.s32.totalorder %v341, %v301
      %vm402 = vcmp.eq.s32.totalorder %v341, %v302
      %vm403 = vcmp.eq.s32.totalorder %v344, %v299
      %vm404 = vcmp.eq.s32.totalorder %v344, %v300
      %vm405 = vcmp.eq.s32.totalorder %v344, %v301
      %vm406 = vcmp.eq.s32.totalorder %v344, %v302
      %vm407 = vcmp.eq.s32.totalorder %v347, %v299
      %vm408 = vcmp.eq.s32.totalorder %v347, %v300
      %vm409 = vcmp.eq.s32.totalorder %v347, %v301
      %vm410 = vcmp.eq.s32.totalorder %v347, %v302
      %vm411 = vcmp.eq.s32.totalorder %v350, %v299
      %vm412 = vcmp.eq.s32.totalorder %v350, %v300
      %vm413 = vcmp.eq.s32.totalorder %v350, %v301
      %vm414 = vcmp.eq.s32.totalorder %v350, %v302
      %v415 = vsel %vm351, 1, 0
      %v416 = vsel %vm352, 1, 0
      %v417 = vsel %vm353, 1, 0
      %v418 = vsel %vm354, 1, 0
      %v419 = vsel %vm355, 1, 0
      %v420 = vsel %vm356, 1, 0
      %v421 = vsel %vm357, 1, 0
      %v422 = vsel %vm358, 1, 0
      %v423 = vsel %vm359, 1, 0
      %v424 = vsel %vm360, 1, 0
      %v425 = vsel %vm361, 1, 0
      %v426 = vsel %vm362, 1, 0
      %v427 = vsel %vm363, 1, 0
      %v428 = vsel %vm364, 1, 0
      %v429 = vsel %vm365, 1, 0
      %v430 = vsel %vm366, 1, 0
      %v431 = vsel %vm367, 1, 0
      %v432 = vsel %vm368, 1, 0
      %v433 = vsel %vm369, 1, 0
      %v434 = vsel %vm370, 1, 0
      %v435 = vsel %vm371, 1, 0
      %v436 = vsel %vm372, 1, 0
      %v437 = vsel %vm373, 1, 0
      %v438 = vsel %vm374, 1, 0
      %v439 = vsel %vm375, 1, 0
      %v440 = vsel %vm376, 1, 0
      %v441 = vsel %vm377, 1, 0
      %v442 = vsel %vm378, 1, 0
      %v443 = vsel %vm379, 1, 0
      %v444 = vsel %vm380, 1, 0
      %v445 = vsel %vm381, 1, 0
      %v446 = vsel %vm382, 1, 0
      %v447 = vsel %vm383, 1, 0
      %v448 = vsel %vm384, 1, 0
      %v449 = vsel %vm385, 1, 0
      %v450 = vsel %vm386, 1, 0
      %v451 = vsel %vm387, 1, 0
      %v452 = vsel %vm388, 1, 0
      %v453 = vsel %vm389, 1, 0
      %v454 = vsel %vm390, 1, 0
      %v455 = vsel %vm391, 1, 0
      %v456 = vsel %vm392, 1, 0
      %v457 = vsel %vm393, 1, 0
      %v458 = vsel %vm394, 1, 0
      %v459 = vsel %vm395, 1, 0
      %v460 = vsel %vm396, 1, 0
      %v461 = vsel %vm397, 1, 0
      %v462 = vsel %vm398, 1, 0
      %v463 = vsel %vm399, 1, 0
      %v464 = vsel %vm400, 1, 0
      %v465 = vsel %vm401, 1, 0
      %v466 = vsel %vm402, 1, 0
      %v467 = vsel %vm403, 1, 0
      %v468 = vsel %vm404, 1, 0
      %v469 = vsel %vm405, 1, 0
      %v470 = vsel %vm406, 1, 0
      %v471 = vsel %vm407, 1, 0
      %v472 = vsel %vm408, 1, 0
      %v473 = vsel %vm409, 1, 0
      %v474 = vsel %vm410, 1, 0
      %v475 = vsel %vm411, 1, 0
      %v476 = vsel %vm412, 1, 0
      %v477 = vsel %vm413, 1, 0
      %v478 = vsel %vm414, 1, 0
      %v479 = vcvt.s32.f32 %v415
      %v480 = vcvt.s32.f32 %v416
      %v481 = vcvt.s32.f32 %v417
      %v482 = vcvt.s32.f32 %v418
      %v483 = vcvt.s32.f32 %v419
      %v484 = vcvt.s32.f32 %v420
      %v485 = vcvt.s32.f32 %v421
      %v486 = vcvt.s32.f32 %v422
      %v487 = vcvt.s32.f32 %v423
      %v488 = vcvt.s32.f32 %v424
      %v489 = vcvt.s32.f32 %v425
      %v490 = vcvt.s32.f32 %v426
      %v491 = vcvt.s32.f32 %v427
      %v492 = vcvt.s32.f32 %v428
      %v493 = vcvt.s32.f32 %v429
      %v494 = vcvt.s32.f32 %v430
      %v495 = vcvt.s32.f32 %v431
      %v496 = vcvt.s32.f32 %v432
      %v497 = vcvt.s32.f32 %v433
      %v498 = vcvt.s32.f32 %v434
      %v499 = vcvt.s32.f32 %v435
      %v500 = vcvt.s32.f32 %v436
      %v501 = vcvt.s32.f32 %v437
      %v502 = vcvt.s32.f32 %v438
      %v503 = vcvt.s32.f32 %v439
      %v504 = vcvt.s32.f32 %v440
      %v505 = vcvt.s32.f32 %v441
      %v506 = vcvt.s32.f32 %v442
      %v507 = vcvt.s32.f32 %v443
      %v508 = vcvt.s32.f32 %v444
      %v509 = vcvt.s32.f32 %v445
      %v510 = vcvt.s32.f32 %v446
      %v511 = vcvt.s32.f32 %v447
      %v512 = vcvt.s32.f32 %v448
      %v513 = vcvt.s32.f32 %v449
      %v514 = vcvt.s32.f32 %v450
      %v515 = vcvt.s32.f32 %v451
      %v516 = vcvt.s32.f32 %v452
      %v517 = vcvt.s32.f32 %v453
      %v518 = vcvt.s32.f32 %v454
      %v519 = vcvt.s32.f32 %v455
      %v520 = vcvt.s32.f32 %v456
      %v521 = vcvt.s32.f32 %v457
      %v522 = vcvt.s32.f32 %v458
      %v523 = vcvt.s32.f32 %v459
      %v524 = vcvt.s32.f32 %v460
      %v525 = vcvt.s32.f32 %v461
      %v526 = vcvt.s32.f32 %v462
      %v527 = vcvt.s32.f32 %v463
      %v528 = vcvt.s32.f32 %v464
      %v529 = vcvt.s32.f32 %v465
      %v530 = vcvt.s32.f32 %v466
      %v531 = vcvt.s32.f32 %v467
      %v532 = vcvt.s32.f32 %v468
      %v533 = vcvt.s32.f32 %v469
      %v534 = vcvt.s32.f32 %v470
      %v535 = vcvt.s32.f32 %v471
      %v536 = vcvt.s32.f32 %v472
      %v537 = vcvt.s32.f32 %v473
      %v538 = vcvt.s32.f32 %v474
      %v539 = vcvt.s32.f32 %v475
      %v540 = vcvt.s32.f32 %v476
      %v541 = vcvt.s32.f32 %v477
      %v542 = vcvt.s32.f32 %v478
      %v543 = vpack.c.bf16 %v483, %v479
      %v544 = vpack.c.bf16 %v484, %v480
      %v545 = vpack.c.bf16 %v485, %v481
      %v546 = vpack.c.bf16 %v486, %v482
      %v547 = vpack.c.bf16 %v491, %v487
      %v548 = vpack.c.bf16 %v492, %v488
      %v549 = vpack.c.bf16 %v493, %v489
      %v550 = vpack.c.bf16 %v494, %v490
      %v551 = vpack.c.bf16 %v499, %v495
      %v552 = vpack.c.bf16 %v500, %v496
      %v553 = vpack.c.bf16 %v501, %v497
      %v554 = vpack.c.bf16 %v502, %v498
      %v555 = vpack.c.bf16 %v507, %v503
      %v556 = vpack.c.bf16 %v508, %v504
      %v557 = vpack.c.bf16 %v509, %v505
      %v558 = vpack.c.bf16 %v510, %v506
      %v559 = vpack.c.bf16 %v515, %v511
      %v560 = vpack.c.bf16 %v516, %v512
      %v561 = vpack.c.bf16 %v517, %v513
      %v562 = vpack.c.bf16 %v518, %v514
      %v563 = vpack.c.bf16 %v523, %v519
      %v564 = vpack.c.bf16 %v524, %v520
      %v565 = vpack.c.bf16 %v525, %v521
      %v566 = vpack.c.bf16 %v526, %v522
      %v567 = vpack.c.bf16 %v531, %v527
      %v568 = vpack.c.bf16 %v532, %v528
      %v569 = vpack.c.bf16 %v533, %v529
      %v570 = vpack.c.bf16 %v534, %v530
      %v571 = vpack.c.bf16 %v539, %v535
      %v572 = vpack.c.bf16 %v540, %v536
      %v573 = vpack.c.bf16 %v541, %v537
      %v574 = vpack.c.bf16 %v542, %v538
      %v575 = vld [vmem:[%s1] sm:$0xf]
      %v576 = vld [vmem:[%s1 + $0x4] sm:$0xf]
      %v577 = vld [vmem:[%s1 + $0x8] sm:$0xf]
      %v578 = vld [vmem:[%s1 + $0xc] sm:$0xf]
      %v579 = vld [vmem:[%s1 + $0x10] sm:$0xf]
      %v580 = vld [vmem:[%s1 + $0x14] sm:$0xf]
      %v581 = vld [vmem:[%s1 + $0x18] sm:$0xf]
      %v582 = vld [vmem:[%s1 + $0x1c] sm:$0xf]
      %v583 = vld [vmem:[%s1 + $0x20] sm:$0xf]
      %v584 = vld [vmem:[%s1 + $0x24] sm:$0xf]
      %v585 = vld [vmem:[%s1 + $0x28] sm:$0xf]
      %v586 = vld [vmem:[%s1 + $0x2c] sm:$0xf]
      %v587 = vld [vmem:[%s1 + $0x30] sm:$0xf]
      %v588 = vld [vmem:[%s1 + $0x34] sm:$0xf]
      %v589 = vld [vmem:[%s1 + $0x38] sm:$0xf]
      %v590 = vld [vmem:[%s1 + $0x3c] sm:$0xf]
      %v591 = vld [vmem:[%s1 + $0x40] sm:$0xf]
      %v592 = vld [vmem:[%s1 + $0x44] sm:$0xf]
      %v593 = vld [vmem:[%s1 + $0x48] sm:$0xf]
      %v594 = vld [vmem:[%s1 + $0x4c] sm:$0xf]
      %v595 = vld [vmem:[%s1 + $0x50] sm:$0xf]
      %v596 = vld [vmem:[%s1 + $0x54] sm:$0xf]
      %v597 = vld [vmem:[%s1 + $0x58] sm:$0xf]
      %v598 = vld [vmem:[%s1 + $0x5c] sm:$0xf]
      %v599 = vld [vmem:[%s1 + $0x60] sm:$0xf]
      %v600 = vld [vmem:[%s1 + $0x64] sm:$0xf]
      %v601 = vld [vmem:[%s1 + $0x68] sm:$0xf]
      %v602 = vld [vmem:[%s1 + $0x6c] sm:$0xf]
      %v603 = vld [vmem:[%s1 + $0x70] sm:$0xf]
      %v604 = vld [vmem:[%s1 + $0x74] sm:$0xf]
      %v605 = vld [vmem:[%s1 + $0x78] sm:$0xf]
      %v606 = vld [vmem:[%s1 + $0x7c] sm:$0xf]
      %v607 = vld [vmem:[%s1 + $0x80] sm:$0xf]
      %v608 = vld [vmem:[%s1 + $0x84] sm:$0xf]
      %v609 = vld [vmem:[%s1 + $0x88] sm:$0xf]
      %v610 = vld [vmem:[%s1 + $0x8c] sm:$0xf]
      %v611 = vld [vmem:[%s1 + $0x90] sm:$0xf]
      %v612 = vld [vmem:[%s1 + $0x94] sm:$0xf]
      %v613 = vld [vmem:[%s1 + $0x98] sm:$0xf]
      %v614 = vld [vmem:[%s1 + $0x9c] sm:$0xf]
      %v615 = vld [vmem:[%s1 + $0xa0] sm:$0xf]
      %v616 = vld [vmem:[%s1 + $0xa4] sm:$0xf]
      %v617 = vld [vmem:[%s1 + $0xa8] sm:$0xf]
      %v618 = vld [vmem:[%s1 + $0xac] sm:$0xf]
      %v619 = vld [vmem:[%s1 + $0xb0] sm:$0xf]
      %v620 = vld [vmem:[%s1 + $0xb4] sm:$0xf]
      %v621 = vld [vmem:[%s1 + $0xb8] sm:$0xf]
      %v622 = vld [vmem:[%s1 + $0xbc] sm:$0xf]
      %v623 = vld [vmem:[%s1 + $0xc0] sm:$0xf]
      %v624 = vld [vmem:[%s1 + $0xc4] sm:$0xf]
      %v625 = vld [vmem:[%s1 + $0xc8] sm:$0xf]
      %v626 = vld [vmem:[%s1 + $0xcc] sm:$0xf]
      %v627 = vld [vmem:[%s1 + $0xd0] sm:$0xf]
      %v628 = vld [vmem:[%s1 + $0xd4] sm:$0xf]
      %v629 = vld [vmem:[%s1 + $0xd8] sm:$0xf]
      %v630 = vld [vmem:[%s1 + $0xdc] sm:$0xf]
      %v631 = vld [vmem:[%s1 + $0xe0] sm:$0xf]
      %v632 = vld [vmem:[%s1 + $0xe4] sm:$0xf]
      %v633 = vld [vmem:[%s1 + $0xe8] sm:$0xf]
      %v634 = vld [vmem:[%s1 + $0xec] sm:$0xf]
      %v635 = vld [vmem:[%s1 + $0xf0] sm:$0xf]
      %v636 = vld [vmem:[%s1 + $0xf4] sm:$0xf]
      %v637 = vld [vmem:[%s1 + $0xf8] sm:$0xf]
      %v638 = vld [vmem:[%s1 + $0xfc] sm:$0xf]
      %v703 = vunpack.c.l.b16 %v575
      %v704 = vunpack.c.l.b16 %v576
      %v705 = vunpack.c.l.b16 %v577
      %v706 = vunpack.c.l.b16 %v578
      %v707 = vunpack.c.l.b16 %v579
      %v708 = vunpack.c.l.b16 %v580
      %v709 = vunpack.c.l.b16 %v581
      %v710 = vunpack.c.l.b16 %v582
      %v711 = vunpack.c.l.b16 %v583
      %v712 = vunpack.c.l.b16 %v584
      %v713 = vunpack.c.l.b16 %v585
      %v714 = vunpack.c.l.b16 %v586
      %v715 = vunpack.c.l.b16 %v587
      %v716 = vunpack.c.l.b16 %v588
      %v717 = vunpack.c.l.b16 %v589
      %v718 = vunpack.c.l.b16 %v590
      %v719 = vunpack.c.l.b16 %v591
      %v720 = vunpack.c.l.b16 %v592
      %v721 = vunpack.c.l.b16 %v593
      %v722 = vunpack.c.l.b16 %v594
      %v723 = vunpack.c.l.b16 %v595
      %v724 = vunpack.c.l.b16 %v596
      %v725 = vunpack.c.l.b16 %v597
      %v726 = vunpack.c.l.b16 %v598
      %v727 = vunpack.c.l.b16 %v599
      %v728 = vunpack.c.l.b16 %v600
      %v729 = vunpack.c.l.b16 %v601
      %v730 = vunpack.c.l.b16 %v602
      %v731 = vunpack.c.l.b16 %v603
      %v732 = vunpack.c.l.b16 %v604
      %v733 = vunpack.c.l.b16 %v605
      %v734 = vunpack.c.l.b16 %v606
      %v735 = vunpack.c.l.b16 %v607
      %v736 = vunpack.c.l.b16 %v608
      %v737 = vunpack.c.l.b16 %v609
      %v738 = vunpack.c.l.b16 %v610
      %v739 = vunpack.c.l.b16 %v611
      %v740 = vunpack.c.l.b16 %v612
      %v741 = vunpack.c.l.b16 %v613
      %v742 = vunpack.c.l.b16 %v614
      %v743 = vunpack.c.l.b16 %v615
      %v744 = vunpack.c.l.b16 %v616
      %v745 = vunpack.c.l.b16 %v617
      %v746 = vunpack.c.l.b16 %v618
      %v747 = vunpack.c.l.b16 %v619
      %v748 = vunpack.c.l.b16 %v620
      %v749 = vunpack.c.l.b16 %v621
      %v750 = vunpack.c.l.b16 %v622
      %v751 = vunpack.c.l.b16 %v623
      %v752 = vunpack.c.l.b16 %v624
      %v753 = vunpack.c.l.b16 %v625
      %v754 = vunpack.c.l.b16 %v626
      %v755 = vunpack.c.l.b16 %v627
      %v756 = vunpack.c.l.b16 %v628
      %v757 = vunpack.c.l.b16 %v629
      %v758 = vunpack.c.l.b16 %v630
      %v759 = vunpack.c.l.b16 %v631
      %v760 = vunpack.c.l.b16 %v632
      %v761 = vunpack.c.l.b16 %v633
      %v762 = vunpack.c.l.b16 %v634
      %v763 = vunpack.c.l.b16 %v635
      %v764 = vunpack.c.l.b16 %v636
      %v765 = vunpack.c.l.b16 %v637
      %v766 = vunpack.c.l.b16 %v638
      %v767 = vpack.c.b16 %v704, %v703
      %v768 = vpack.c.b16 %v706, %v705
      %v769 = vpack.c.b16 %v708, %v707
      %v770 = vpack.c.b16 %v710, %v709
      %v771 = vpack.c.b16 %v712, %v711
      %v772 = vpack.c.b16 %v714, %v713
      %v773 = vpack.c.b16 %v716, %v715
      %v774 = vpack.c.b16 %v718, %v717
      %v775 = vpack.c.b16 %v720, %v719
      %v776 = vpack.c.b16 %v722, %v721
      %v777 = vpack.c.b16 %v724, %v723
      %v778 = vpack.c.b16 %v726, %v725
      %v779 = vpack.c.b16 %v728, %v727
      %v780 = vpack.c.b16 %v730, %v729
      %v781 = vpack.c.b16 %v732, %v731
      %v782 = vpack.c.b16 %v734, %v733
      %v783 = vpack.c.b16 %v736, %v735
      %v784 = vpack.c.b16 %v738, %v737
      %v785 = vpack.c.b16 %v740, %v739
      %v786 = vpack.c.b16 %v742, %v741
      %v787 = vpack.c.b16 %v744, %v743
      %v788 = vpack.c.b16 %v746, %v745
      %v789 = vpack.c.b16 %v748, %v747
      %v790 = vpack.c.b16 %v750, %v749
      %v791 = vpack.c.b16 %v752, %v751
      %v792 = vpack.c.b16 %v754, %v753
      %v793 = vpack.c.b16 %v756, %v755
      %v794 = vpack.c.b16 %v758, %v757
      %v795 = vpack.c.b16 %v760, %v759
      %v796 = vpack.c.b16 %v762, %v761
      %v797 = vpack.c.b16 %v764, %v763
      %v798 = vpack.c.b16 %v766, %v765
      %831 = vmatpush.bf16.msra.mxu0 %v774
      %832 = vmatpush.bf16.msra.mxu0 %v773
      %833 = vmatpush.bf16.msra.mxu0 %v772
      %834 = vmatpush.bf16.msra.mxu0 %v771
      %835 = vmatpush.bf16.msra.mxu0 %v770
      %836 = vmatpush.bf16.msra.mxu0 %v769
      %837 = vmatpush.bf16.msra.mxu0 %v768
      %838 = vmatpush.bf16.msra.mxu0 %v767
      %839 = vmatmul.bf16.gmra.mxu0 %v543
      %v840 = vpop.f32.mrf.mxu0
      %v841 = vadd.f32 0.0, %v840
      %v842 = vpop.f32.mrf.mxu0
      %v843 = vadd.f32 0.0, %v842
      %844 = vmatmul.bf16.gmra.mxu0 %v547
      %v845 = vpop.f32.mrf.mxu0
      %v846 = vadd.f32 0.0, %v845
      %v847 = vpop.f32.mrf.mxu0
      %v848 = vadd.f32 0.0, %v847
      %849 = vmatmul.bf16.gmra.mxu0 %v551
      %v850 = vpop.f32.mrf.mxu0
      %v851 = vadd.f32 0.0, %v850
      %v852 = vpop.f32.mrf.mxu0
      %v853 = vadd.f32 0.0, %v852
      %854 = vmatmul.bf16.gmra.mxu0 %v555
      %v855 = vpop.f32.mrf.mxu0
      %v856 = vadd.f32 0.0, %v855
      %v857 = vpop.f32.mrf.mxu0
      %v858 = vadd.f32 0.0, %v857
      %859 = vmatmul.bf16.gmra.mxu0 %v559
      %v860 = vpop.f32.mrf.mxu0
      %v861 = vadd.f32 0.0, %v860
      %v862 = vpop.f32.mrf.mxu0
      %v863 = vadd.f32 0.0, %v862
      %864 = vmatmul.bf16.gmra.mxu0 %v563
      %v865 = vpop.f32.mrf.mxu0
      %v866 = vadd.f32 0.0, %v865
      %v867 = vpop.f32.mrf.mxu0
      %v868 = vadd.f32 0.0, %v867
      %869 = vmatmul.bf16.gmra.mxu0 %v567
      %v870 = vpop.f32.mrf.mxu0
      %v871 = vadd.f32 0.0, %v870
      %v872 = vpop.f32.mrf.mxu0
      %v873 = vadd.f32 0.0, %v872
      %874 = vmatmul.bf16.gmra.mxu0 %v571
      %v875 = vpop.f32.mrf.mxu0
      %v876 = vadd.f32 0.0, %v875
      %v877 = vpop.f32.mrf.mxu0
      %v878 = vadd.f32 0.0, %v877
      %879 = vdwg.mxu0
      %880 = vmatpush.bf16.msra.mxu0 %v782
      %881 = vmatpush.bf16.msra.mxu0 %v781
      %882 = vmatpush.bf16.msra.mxu0 %v780
      %883 = vmatpush.bf16.msra.mxu0 %v779
      %884 = vmatpush.bf16.msra.mxu0 %v778
      %885 = vmatpush.bf16.msra.mxu0 %v777
      %886 = vmatpush.bf16.msra.mxu0 %v776
      %887 = vmatpush.bf16.msra.mxu0 %v775
      %888 = vmatmul.bf16.gmra.mxu0 %v544
      %v889 = vpop.f32.mrf.mxu0
      %v890 = vadd.f32 %v841, %v889
      %v891 = vpop.f32.mrf.mxu0
      %v892 = vadd.f32 %v843, %v891
      %893 = vmatmul.bf16.gmra.mxu0 %v548
      %v894 = vpop.f32.mrf.mxu0
      %v895 = vadd.f32 %v846, %v894
      %v896 = vpop.f32.mrf.mxu0
      %v897 = vadd.f32 %v848, %v896
      %898 = vmatmul.bf16.gmra.mxu0 %v552
      %v899 = vpop.f32.mrf.mxu0
      %v900 = vadd.f32 %v851, %v899
      %v901 = vpop.f32.mrf.mxu0
      %v902 = vadd.f32 %v853, %v901
      %903 = vmatmul.bf16.gmra.mxu0 %v556
      %v904 = vpop.f32.mrf.mxu0
      %v905 = vadd.f32 %v856, %v904
      %v906 = vpop.f32.mrf.mxu0
      %v907 = vadd.f32 %v858, %v906
      %908 = vmatmul.bf16.gmra.mxu0 %v560
      %v909 = vpop.f32.mrf.mxu0
      %v910 = vadd.f32 %v861, %v909
      %v911 = vpop.f32.mrf.mxu0
      %v912 = vadd.f32 %v863, %v911
      %913 = vmatmul.bf16.gmra.mxu0 %v564
      %v914 = vpop.f32.mrf.mxu0
      %v915 = vadd.f32 %v866, %v914
      %v916 = vpop.f32.mrf.mxu0
      %v917 = vadd.f32 %v868, %v916
      %918 = vmatmul.bf16.gmra.mxu0 %v568
      %v919 = vpop.f32.mrf.mxu0
      %v920 = vadd.f32 %v871, %v919
      %v921 = vpop.f32.mrf.mxu0
      %v922 = vadd.f32 %v873, %v921
      %923 = vmatmul.bf16.gmra.mxu0 %v572
      %v924 = vpop.f32.mrf.mxu0
      %v925 = vadd.f32 %v876, %v924
      %v926 = vpop.f32.mrf.mxu0
      %v927 = vadd.f32 %v878, %v926
      %928 = vdwg.mxu0
      %929 = vmatpush.bf16.msra.mxu0 %v790
      %930 = vmatpush.bf16.msra.mxu0 %v789
      %931 = vmatpush.bf16.msra.mxu0 %v788
      %932 = vmatpush.bf16.msra.mxu0 %v787
      %933 = vmatpush.bf16.msra.mxu0 %v786
      %934 = vmatpush.bf16.msra.mxu0 %v785
      %935 = vmatpush.bf16.msra.mxu0 %v784
      %936 = vmatpush.bf16.msra.mxu0 %v783
      %937 = vmatmul.bf16.gmra.mxu0 %v545
      %v938 = vpop.f32.mrf.mxu0
      %v939 = vadd.f32 %v890, %v938
      %v940 = vpop.f32.mrf.mxu0
      %v941 = vadd.f32 %v892, %v940
      %942 = vmatmul.bf16.gmra.mxu0 %v549
      %v943 = vpop.f32.mrf.mxu0
      %v944 = vadd.f32 %v895, %v943
      %v945 = vpop.f32.mrf.mxu0
      %v946 = vadd.f32 %v897, %v945
      %947 = vmatmul.bf16.gmra.mxu0 %v553
      %v948 = vpop.f32.mrf.mxu0
      %v949 = vadd.f32 %v900, %v948
      %v950 = vpop.f32.mrf.mxu0
      %v951 = vadd.f32 %v902, %v950
      %952 = vmatmul.bf16.gmra.mxu0 %v557
      %v953 = vpop.f32.mrf.mxu0
      %v954 = vadd.f32 %v905, %v953
      %v955 = vpop.f32.mrf.mxu0
      %v956 = vadd.f32 %v907, %v955
      %957 = vmatmul.bf16.gmra.mxu0 %v561
      %v958 = vpop.f32.mrf.mxu0
      %v959 = vadd.f32 %v910, %v958
      %v960 = vpop.f32.mrf.mxu0
      %v961 = vadd.f32 %v912, %v960
      %962 = vmatmul.bf16.gmra.mxu0 %v565
      %v963 = vpop.f32.mrf.mxu0
      %v964 = vadd.f32 %v915, %v963
      %v965 = vpop.f32.mrf.mxu0
      %v966 = vadd.f32 %v917, %v965
      %967 = vmatmul.bf16.gmra.mxu0 %v569
      %v968 = vpop.f32.mrf.mxu0
      %v969 = vadd.f32 %v920, %v968
      %v970 = vpop.f32.mrf.mxu0
      %v971 = vadd.f32 %v922, %v970
      %972 = vmatmul.bf16.gmra.mxu0 %v573
      %v973 = vpop.f32.mrf.mxu0
      %v974 = vadd.f32 %v925, %v973
      %v975 = vpop.f32.mrf.mxu0
      %v976 = vadd.f32 %v927, %v975
      %977 = vdwg.mxu0
      %978 = vmatpush.bf16.msra.mxu0 %v798
      %979 = vmatpush.bf16.msra.mxu0 %v797
      %980 = vmatpush.bf16.msra.mxu0 %v796
      %981 = vmatpush.bf16.msra.mxu0 %v795
      %982 = vmatpush.bf16.msra.mxu0 %v794
      %983 = vmatpush.bf16.msra.mxu0 %v793
      %984 = vmatpush.bf16.msra.mxu0 %v792
      %985 = vmatpush.bf16.msra.mxu0 %v791
      %986 = vmatmul.bf16.gmra.mxu0 %v546
      %v987 = vpop.f32.mrf.mxu0
      %v988 = vadd.f32 %v939, %v987
      %v989 = vpop.f32.mrf.mxu0
      %v990 = vadd.f32 %v941, %v989
      %991 = vmatmul.bf16.gmra.mxu0 %v550
      %v992 = vpop.f32.mrf.mxu0
      %v993 = vadd.f32 %v944, %v992
      %v994 = vpop.f32.mrf.mxu0
      %v995 = vadd.f32 %v946, %v994
      %996 = vmatmul.bf16.gmra.mxu0 %v554
      %v997 = vpop.f32.mrf.mxu0
      %v998 = vadd.f32 %v949, %v997
      %v999 = vpop.f32.mrf.mxu0
      %v1000 = vadd.f32 %v951, %v999
      %1001 = vmatmul.bf16.gmra.mxu0 %v558
      %v1002 = vpop.f32.mrf.mxu0
      %v1003 = vadd.f32 %v954, %v1002
      %v1004 = vpop.f32.mrf.mxu0
      %v1005 = vadd.f32 %v956, %v1004
      %1006 = vmatmul.bf16.gmra.mxu0 %v562
      %v1007 = vpop.f32.mrf.mxu0
      %v1008 = vadd.f32 %v959, %v1007
      %v1009 = vpop.f32.mrf.mxu0
      %v1010 = vadd.f32 %v961, %v1009
      %1011 = vmatmul.bf16.gmra.mxu0 %v566
      %v1012 = vpop.f32.mrf.mxu0
      %v1013 = vadd.f32 %v964, %v1012
      %v1014 = vpop.f32.mrf.mxu0
      %v1015 = vadd.f32 %v966, %v1014
      %1016 = vmatmul.bf16.gmra.mxu0 %v570
      %v1017 = vpop.f32.mrf.mxu0
      %v1018 = vadd.f32 %v969, %v1017
      %v1019 = vpop.f32.mrf.mxu0
      %v1020 = vadd.f32 %v971, %v1019
      %1021 = vmatmul.bf16.gmra.mxu0 %v574
      %v1022 = vpop.f32.mrf.mxu0
      %v1023 = vadd.f32 %v974, %v1022
      %v1024 = vpop.f32.mrf.mxu0
      %v1025 = vadd.f32 %v976, %v1024
      %1026 = vdwg.mxu0
      %v1027 = vmul.f32 %v988, %v988
      %v1028 = vmul.f32 %v990, %v990
      %v1029 = vmul.f32 %v993, %v993
      %v1030 = vmul.f32 %v995, %v995
      %v1031 = vmul.f32 %v998, %v998
      %v1032 = vmul.f32 %v1000, %v1000
      %v1033 = vmul.f32 %v1003, %v1003
      %v1034 = vmul.f32 %v1005, %v1005
      %v1035 = vmul.f32 %v1008, %v1008
      %v1036 = vmul.f32 %v1010, %v1010
      %v1037 = vmul.f32 %v1013, %v1013
      %v1038 = vmul.f32 %v1015, %v1015
      %v1039 = vmul.f32 %v1018, %v1018
      %v1040 = vmul.f32 %v1020, %v1020
      %v1041 = vmul.f32 %v1023, %v1023
      %v1042 = vmul.f32 %v1025, %v1025
      %1043 = vadd.xlane.f32.xlu0 %v1027
      %v1044 = vpop.xlane.xlu0 %1043
      %1045 = vadd.xlane.f32.xlu0 %v1028
      %v1046 = vpop.xlane.xlu0 %1045
      %1047 = vadd.xlane.f32.xlu0 %v1029
      %v1048 = vpop.xlane.xlu0 %1047
      %1049 = vadd.xlane.f32.xlu0 %v1030
      %v1050 = vpop.xlane.xlu0 %1049
      %1051 = vadd.xlane.f32.xlu0 %v1031
      %v1052 = vpop.xlane.xlu0 %1051
      %1053 = vadd.xlane.f32.xlu0 %v1032
      %v1054 = vpop.xlane.xlu0 %1053
      %1055 = vadd.xlane.f32.xlu0 %v1033
      %v1056 = vpop.xlane.xlu0 %1055
      %1057 = vadd.xlane.f32.xlu0 %v1034
      %v1058 = vpop.xlane.xlu0 %1057
      %1059 = vadd.xlane.f32.xlu0 %v1035
      %v1060 = vpop.xlane.xlu0 %1059
      %1061 = vadd.xlane.f32.xlu0 %v1036
      %v1062 = vpop.xlane.xlu0 %1061
      %1063 = vadd.xlane.f32.xlu0 %v1037
      %v1064 = vpop.xlane.xlu0 %1063
      %1065 = vadd.xlane.f32.xlu0 %v1038
      %v1066 = vpop.xlane.xlu0 %1065
      %1067 = vadd.xlane.f32.xlu0 %v1039
      %v1068 = vpop.xlane.xlu0 %1067
      %1069 = vadd.xlane.f32.xlu0 %v1040
      %v1070 = vpop.xlane.xlu0 %1069
      %1071 = vadd.xlane.f32.xlu0 %v1041
      %v1072 = vpop.xlane.xlu0 %1071
      %1073 = vadd.xlane.f32.xlu0 %v1042
      %v1074 = vpop.xlane.xlu0 %1073
      %v1075 = vrsqrt.pop %v1044
      %v1076 = vmul.f32 %v1075, %v1044
      %v1077 = vmul.f32 %v1076, %v1075
      %v1078 = vmul.f32 0.5, %v1077
      %v1079 = vsub.f32 1.5, %v1078
      %v1080 = vmul.f32 %v1075, %v1079
      %v1081 = vmul.f32 %v1044, %v1080
      %vm1082 = vcmp.eq.f32.partialorder %v1044, inf
      %v1083 = vsel %vm1082, %v1044, %v1081
      %vm1084 = vcmp.eq.f32.partialorder %v1044, 0.0
      %v1085 = vand.u32 %v1044, 2147483648
      %v1086 = vsel %vm1084, %v1085, %v1083
      %v1087 = vrsqrt.pop %v1046
      %v1088 = vmul.f32 %v1087, %v1046
      %v1089 = vmul.f32 %v1088, %v1087
      %v1090 = vmul.f32 0.5, %v1089
      %v1091 = vsub.f32 1.5, %v1090
      %v1092 = vmul.f32 %v1087, %v1091
      %v1093 = vmul.f32 %v1046, %v1092
      %vm1094 = vcmp.eq.f32.partialorder %v1046, inf
      %v1095 = vsel %vm1094, %v1046, %v1093
      %vm1096 = vcmp.eq.f32.partialorder %v1046, 0.0
      %v1097 = vand.u32 %v1046, 2147483648
      %v1098 = vsel %vm1096, %v1097, %v1095
      %v1099 = vrsqrt.pop %v1048
      %v1100 = vmul.f32 %v1099, %v1048
      %v1101 = vmul.f32 %v1100, %v1099
      %v1102 = vmul.f32 0.5, %v1101
      %v1103 = vsub.f32 1.5, %v1102
      %v1104 = vmul.f32 %v1099, %v1103
      %v1105 = vmul.f32 %v1048, %v1104
      %vm1106 = vcmp.eq.f32.partialorder %v1048, inf
      %v1107 = vsel %vm1106, %v1048, %v1105
      %vm1108 = vcmp.eq.f32.partialorder %v1048, 0.0
      %v1109 = vand.u32 %v1048, 2147483648
      %v1110 = vsel %vm1108, %v1109, %v1107
      %v1111 = vrsqrt.pop %v1050
      %v1112 = vmul.f32 %v1111, %v1050
      %v1113 = vmul.f32 %v1112, %v1111
      %v1114 = vmul.f32 0.5, %v1113
      %v1115 = vsub.f32 1.5, %v1114
      %v1116 = vmul.f32 %v1111, %v1115
      %v1117 = vmul.f32 %v1050, %v1116
      %vm1118 = vcmp.eq.f32.partialorder %v1050, inf
      %v1119 = vsel %vm1118, %v1050, %v1117
      %vm1120 = vcmp.eq.f32.partialorder %v1050, 0.0
      %v1121 = vand.u32 %v1050, 2147483648
      %v1122 = vsel %vm1120, %v1121, %v1119
      %v1123 = vrsqrt.pop %v1052
      %v1124 = vmul.f32 %v1123, %v1052
      %v1125 = vmul.f32 %v1124, %v1123
      %v1126 = vmul.f32 0.5, %v1125
      %v1127 = vsub.f32 1.5, %v1126
      %v1128 = vmul.f32 %v1123, %v1127
      %v1129 = vmul.f32 %v1052, %v1128
      %vm1130 = vcmp.eq.f32.partialorder %v1052, inf
      %v1131 = vsel %vm1130, %v1052, %v1129
      %vm1132 = vcmp.eq.f32.partialorder %v1052, 0.0
      %v1133 = vand.u32 %v1052, 2147483648
      %v1134 = vsel %vm1132, %v1133, %v1131
      %v1135 = vrsqrt.pop %v1054
      %v1136 = vmul.f32 %v1135, %v1054
      %v1137 = vmul.f32 %v1136, %v1135
      %v1138 = vmul.f32 0.5, %v1137
      %v1139 = vsub.f32 1.5, %v1138
      %v1140 = vmul.f32 %v1135, %v1139
      %v1141 = vmul.f32 %v1054, %v1140
      %vm1142 = vcmp.eq.f32.partialorder %v1054, inf
      %v1143 = vsel %vm1142, %v1054, %v1141
      %vm1144 = vcmp.eq.f32.partialorder %v1054, 0.0
      %v1145 = vand.u32 %v1054, 2147483648
      %v1146 = vsel %vm1144, %v1145, %v1143
      %v1147 = vrsqrt.pop %v1056
      %v1148 = vmul.f32 %v1147, %v1056
      %v1149 = vmul.f32 %v1148, %v1147
      %v1150 = vmul.f32 0.5, %v1149
      %v1151 = vsub.f32 1.5, %v1150
      %v1152 = vmul.f32 %v1147, %v1151
      %v1153 = vmul.f32 %v1056, %v1152
      %vm1154 = vcmp.eq.f32.partialorder %v1056, inf
      %v1155 = vsel %vm1154, %v1056, %v1153
      %vm1156 = vcmp.eq.f32.partialorder %v1056, 0.0
      %v1157 = vand.u32 %v1056, 2147483648
      %v1158 = vsel %vm1156, %v1157, %v1155
      %v1159 = vrsqrt.pop %v1058
      %v1160 = vmul.f32 %v1159, %v1058
      %v1161 = vmul.f32 %v1160, %v1159
      %v1162 = vmul.f32 0.5, %v1161
      %v1163 = vsub.f32 1.5, %v1162
      %v1164 = vmul.f32 %v1159, %v1163
      %v1165 = vmul.f32 %v1058, %v1164
      %vm1166 = vcmp.eq.f32.partialorder %v1058, inf
      %v1167 = vsel %vm1166, %v1058, %v1165
      %vm1168 = vcmp.eq.f32.partialorder %v1058, 0.0
      %v1169 = vand.u32 %v1058, 2147483648
      %v1170 = vsel %vm1168, %v1169, %v1167
      %v1171 = vrsqrt.pop %v1060
      %v1172 = vmul.f32 %v1171, %v1060
      %v1173 = vmul.f32 %v1172, %v1171
      %v1174 = vmul.f32 0.5, %v1173
      %v1175 = vsub.f32 1.5, %v1174
      %v1176 = vmul.f32 %v1171, %v1175
      %v1177 = vmul.f32 %v1060, %v1176
      %vm1178 = vcmp.eq.f32.partialorder %v1060, inf
      %v1179 = vsel %vm1178, %v1060, %v1177
      %vm1180 = vcmp.eq.f32.partialorder %v1060, 0.0
      %v1181 = vand.u32 %v1060, 2147483648
      %v1182 = vsel %vm1180, %v1181, %v1179
      %v1183 = vrsqrt.pop %v1062
      %v1184 = vmul.f32 %v1183, %v1062
      %v1185 = vmul.f32 %v1184, %v1183
      %v1186 = vmul.f32 0.5, %v1185
      %v1187 = vsub.f32 1.5, %v1186
      %v1188 = vmul.f32 %v1183, %v1187
      %v1189 = vmul.f32 %v1062, %v1188
      %vm1190 = vcmp.eq.f32.partialorder %v1062, inf
      %v1191 = vsel %vm1190, %v1062, %v1189
      %vm1192 = vcmp.eq.f32.partialorder %v1062, 0.0
      %v1193 = vand.u32 %v1062, 2147483648
      %v1194 = vsel %vm1192, %v1193, %v1191
      %v1195 = vrsqrt.pop %v1064
      %v1196 = vmul.f32 %v1195, %v1064
      %v1197 = vmul.f32 %v1196, %v1195
      %v1198 = vmul.f32 0.5, %v1197
      %v1199 = vsub.f32 1.5, %v1198
      %v1200 = vmul.f32 %v1195, %v1199
      %v1201 = vmul.f32 %v1064, %v1200
      %vm1202 = vcmp.eq.f32.partialorder %v1064, inf
      %v1203 = vsel %vm1202, %v1064, %v1201
      %vm1204 = vcmp.eq.f32.partialorder %v1064, 0.0
      %v1205 = vand.u32 %v1064, 2147483648
      %v1206 = vsel %vm1204, %v1205, %v1203
      %v1207 = vrsqrt.pop %v1066
      %v1208 = vmul.f32 %v1207, %v1066
      %v1209 = vmul.f32 %v1208, %v1207
      %v1210 = vmul.f32 0.5, %v1209
      %v1211 = vsub.f32 1.5, %v1210
      %v1212 = vmul.f32 %v1207, %v1211
      %v1213 = vmul.f32 %v1066, %v1212
      %vm1214 = vcmp.eq.f32.partialorder %v1066, inf
      %v1215 = vsel %vm1214, %v1066, %v1213
      %vm1216 = vcmp.eq.f32.partialorder %v1066, 0.0
      %v1217 = vand.u32 %v1066, 2147483648
      %v1218 = vsel %vm1216, %v1217, %v1215
      %v1219 = vrsqrt.pop %v1068
      %v1220 = vmul.f32 %v1219, %v1068
      %v1221 = vmul.f32 %v1220, %v1219
      %v1222 = vmul.f32 0.5, %v1221
      %v1223 = vsub.f32 1.5, %v1222
      %v1224 = vmul.f32 %v1219, %v1223
      %v1225 = vmul.f32 %v1068, %v1224
      %vm1226 = vcmp.eq.f32.partialorder %v1068, inf
      %v1227 = vsel %vm1226, %v1068, %v1225
      %vm1228 = vcmp.eq.f32.partialorder %v1068, 0.0
      %v1229 = vand.u32 %v1068, 2147483648
      %v1230 = vsel %vm1228, %v1229, %v1227
      %v1231 = vrsqrt.pop %v1070
      %v1232 = vmul.f32 %v1231, %v1070
      %v1233 = vmul.f32 %v1232, %v1231
      %v1234 = vmul.f32 0.5, %v1233
      %v1235 = vsub.f32 1.5, %v1234
      %v1236 = vmul.f32 %v1231, %v1235
      %v1237 = vmul.f32 %v1070, %v1236
      %vm1238 = vcmp.eq.f32.partialorder %v1070, inf
      %v1239 = vsel %vm1238, %v1070, %v1237
      %vm1240 = vcmp.eq.f32.partialorder %v1070, 0.0
      %v1241 = vand.u32 %v1070, 2147483648
      %v1242 = vsel %vm1240, %v1241, %v1239
      %v1243 = vrsqrt.pop %v1072
      %v1244 = vmul.f32 %v1243, %v1072
      %v1245 = vmul.f32 %v1244, %v1243
      %v1246 = vmul.f32 0.5, %v1245
      %v1247 = vsub.f32 1.5, %v1246
      %v1248 = vmul.f32 %v1243, %v1247
      %v1249 = vmul.f32 %v1072, %v1248
      %vm1250 = vcmp.eq.f32.partialorder %v1072, inf
      %v1251 = vsel %vm1250, %v1072, %v1249
      %vm1252 = vcmp.eq.f32.partialorder %v1072, 0.0
      %v1253 = vand.u32 %v1072, 2147483648
      %v1254 = vsel %vm1252, %v1253, %v1251
      %v1255 = vrsqrt.pop %v1074
      %v1256 = vmul.f32 %v1255, %v1074
      %v1257 = vmul.f32 %v1256, %v1255
      %v1258 = vmul.f32 0.5, %v1257
      %v1259 = vsub.f32 1.5, %v1258
      %v1260 = vmul.f32 %v1255, %v1259
      %v1261 = vmul.f32 %v1074, %v1260
      %vm1262 = vcmp.eq.f32.partialorder %v1074, inf
      %v1263 = vsel %vm1262, %v1074, %v1261
      %vm1264 = vcmp.eq.f32.partialorder %v1074, 0.0
      %v1265 = vand.u32 %v1074, 2147483648
      %v1266 = vsel %vm1264, %v1265, %v1263
      %vm1267 = vcmp.gt.f32.partialorder %v1086, 1.0
      %vm1268 = vcmp.gt.f32.partialorder %v1098, 1.0
      %vm1269 = vcmp.gt.f32.partialorder %v1110, 1.0
      %vm1270 = vcmp.gt.f32.partialorder %v1122, 1.0
      %vm1271 = vcmp.gt.f32.partialorder %v1134, 1.0
      %vm1272 = vcmp.gt.f32.partialorder %v1146, 1.0
      %vm1273 = vcmp.gt.f32.partialorder %v1158, 1.0
      %vm1274 = vcmp.gt.f32.partialorder %v1170, 1.0
      %vm1275 = vcmp.gt.f32.partialorder %v1182, 1.0
      %vm1276 = vcmp.gt.f32.partialorder %v1194, 1.0
      %vm1277 = vcmp.gt.f32.partialorder %v1206, 1.0
      %vm1278 = vcmp.gt.f32.partialorder %v1218, 1.0
      %vm1279 = vcmp.gt.f32.partialorder %v1230, 1.0
      %vm1280 = vcmp.gt.f32.partialorder %v1242, 1.0
      %vm1281 = vcmp.gt.f32.partialorder %v1254, 1.0
      %vm1282 = vcmp.gt.f32.partialorder %v1266, 1.0
      %v1283 = vadd.f32 %v1086, 1e-07
      %v1284 = vadd.f32 %v1098, 1e-07
      %v1285 = vadd.f32 %v1110, 1e-07
      %v1286 = vadd.f32 %v1122, 1e-07
      %v1287 = vadd.f32 %v1134, 1e-07
      %v1288 = vadd.f32 %v1146, 1e-07
      %v1289 = vadd.f32 %v1158, 1e-07
      %v1290 = vadd.f32 %v1170, 1e-07
      %v1291 = vadd.f32 %v1182, 1e-07
      %v1292 = vadd.f32 %v1194, 1e-07
      %v1293 = vadd.f32 %v1206, 1e-07
      %v1294 = vadd.f32 %v1218, 1e-07
      %v1295 = vadd.f32 %v1230, 1e-07
      %v1296 = vadd.f32 %v1242, 1e-07
      %v1297 = vadd.f32 %v1254, 1e-07
      %v1298 = vadd.f32 %v1266, 1e-07
      %v1299 = vrcp.pop %v1283
      %v1300 = vrcp.pop %v1284
      %v1301 = vrcp.pop %v1285
      %v1302 = vrcp.pop %v1286
      %v1303 = vrcp.pop %v1287
      %v1304 = vrcp.pop %v1288
      %v1305 = vrcp.pop %v1289
      %v1306 = vrcp.pop %v1290
      %v1307 = vrcp.pop %v1291
      %v1308 = vrcp.pop %v1292
      %v1309 = vrcp.pop %v1293
      %v1310 = vrcp.pop %v1294
      %v1311 = vrcp.pop %v1295
      %v1312 = vrcp.pop %v1296
      %v1313 = vrcp.pop %v1297
      %v1314 = vrcp.pop %v1298
      %v1315 = vsel %vm1267, %v1299, 1.0
      %v1316 = vsel %vm1268, %v1300, 1.0
      %v1317 = vsel %vm1269, %v1301, 1.0
      %v1318 = vsel %vm1270, %v1302, 1.0
      %v1319 = vsel %vm1271, %v1303, 1.0
      %v1320 = vsel %vm1272, %v1304, 1.0
      %v1321 = vsel %vm1273, %v1305, 1.0
      %v1322 = vsel %vm1274, %v1306, 1.0
      %v1323 = vsel %vm1275, %v1307, 1.0
      %v1324 = vsel %vm1276, %v1308, 1.0
      %v1325 = vsel %vm1277, %v1309, 1.0
      %v1326 = vsel %vm1278, %v1310, 1.0
      %v1327 = vsel %vm1279, %v1311, 1.0
      %v1328 = vsel %vm1280, %v1312, 1.0
      %v1329 = vsel %vm1281, %v1313, 1.0
      %v1330 = vsel %vm1282, %v1314, 1.0
      %v1331 = vmul.f32 %v988, %v1315
      %v1332 = vmul.f32 %v990, %v1316
      %v1333 = vmul.f32 %v993, %v1317
      %v1334 = vmul.f32 %v995, %v1318
      %v1335 = vmul.f32 %v998, %v1319
      %v1336 = vmul.f32 %v1000, %v1320
      %v1337 = vmul.f32 %v1003, %v1321
      %v1338 = vmul.f32 %v1005, %v1322
      %v1339 = vmul.f32 %v1008, %v1323
      %v1340 = vmul.f32 %v1010, %v1324
      %v1341 = vmul.f32 %v1013, %v1325
      %v1342 = vmul.f32 %v1015, %v1326
      %v1343 = vmul.f32 %v1018, %v1327
      %v1344 = vmul.f32 %v1020, %v1328
      %v1345 = vmul.f32 %v1023, %v1329
      %v1346 = vmul.f32 %v1025, %v1330
      %v1347 = vpack.c.bf16 %v1332, %v1331
      %v1348 = vpack.c.bf16 %v1334, %v1333
      %v1349 = vpack.c.bf16 %v1336, %v1335
      %v1350 = vpack.c.bf16 %v1338, %v1337
      %v1351 = vpack.c.bf16 %v1340, %v1339
      %v1352 = vpack.c.bf16 %v1342, %v1341
      %v1353 = vpack.c.bf16 %v1344, %v1343
      %v1354 = vpack.c.bf16 %v1346, %v1345
      %v1355 = vld [vmem:[%s273] sm:$0xff]
      %v1356 = vld [vmem:[%s273 + $0x8] sm:$0xff]
      %v1357 = vld [vmem:[%s273 + $0x10] sm:$0xff]
      %v1358 = vld [vmem:[%s273 + $0x18] sm:$0xff]
      %v1359 = vld [vmem:[%s273 + $0x20] sm:$0xff]
      %v1360 = vld [vmem:[%s273 + $0x28] sm:$0xff]
      %v1361 = vld [vmem:[%s273 + $0x30] sm:$0xff]
      %v1362 = vld [vmem:[%s273 + $0x38] sm:$0xff]
      %v1363 = vld [vmem:[%s273 + $0x40] sm:$0xff]
      %v1364 = vld [vmem:[%s273 + $0x48] sm:$0xff]
      %v1365 = vld [vmem:[%s273 + $0x50] sm:$0xff]
      %v1366 = vld [vmem:[%s273 + $0x58] sm:$0xff]
      %v1367 = vld [vmem:[%s273 + $0x60] sm:$0xff]
      %v1368 = vld [vmem:[%s273 + $0x68] sm:$0xff]
      %v1369 = vld [vmem:[%s273 + $0x70] sm:$0xff]
      %v1370 = vld [vmem:[%s273 + $0x78] sm:$0xff]
      %v1371 = vld [vmem:[%s273 + $0x80] sm:$0xff]
      %v1372 = vld [vmem:[%s273 + $0x88] sm:$0xff]
      %v1373 = vld [vmem:[%s273 + $0x90] sm:$0xff]
      %v1374 = vld [vmem:[%s273 + $0x98] sm:$0xff]
      %v1375 = vld [vmem:[%s273 + $0xa0] sm:$0xff]
      %v1376 = vld [vmem:[%s273 + $0xa8] sm:$0xff]
      %v1377 = vld [vmem:[%s273 + $0xb0] sm:$0xff]
      %v1378 = vld [vmem:[%s273 + $0xb8] sm:$0xff]
      %v1379 = vld [vmem:[%s273 + $0xc0] sm:$0xff]
      %v1380 = vld [vmem:[%s273 + $0xc8] sm:$0xff]
      %v1381 = vld [vmem:[%s273 + $0xd0] sm:$0xff]
      %v1382 = vld [vmem:[%s273 + $0xd8] sm:$0xff]
      %v1383 = vld [vmem:[%s273 + $0xe0] sm:$0xff]
      %v1384 = vld [vmem:[%s273 + $0xe8] sm:$0xff]
      %v1385 = vld [vmem:[%s273 + $0xf0] sm:$0xff]
      %v1386 = vld [vmem:[%s273 + $0xf8] sm:$0xff]
      %v1387 = vpack.c.bf16 %v1357, %v1355
      %v1388 = vpack.c.bf16 %v1358, %v1356
      %v1389 = vpack.c.bf16 %v1361, %v1359
      %v1390 = vpack.c.bf16 %v1362, %v1360
      %v1391 = vpack.c.bf16 %v1365, %v1363
      %v1392 = vpack.c.bf16 %v1366, %v1364
      %v1393 = vpack.c.bf16 %v1369, %v1367
      %v1394 = vpack.c.bf16 %v1370, %v1368
      %v1395 = vpack.c.bf16 %v1373, %v1371
      %v1396 = vpack.c.bf16 %v1374, %v1372
      %v1397 = vpack.c.bf16 %v1377, %v1375
      %v1398 = vpack.c.bf16 %v1378, %v1376
      %v1399 = vpack.c.bf16 %v1381, %v1379
      %v1400 = vpack.c.bf16 %v1382, %v1380
      %v1401 = vpack.c.bf16 %v1385, %v1383
      %v1402 = vpack.c.bf16 %v1386, %v1384
      %v1403 = vld [vmem:[%s3] sm:$0xff]
      %v1404 = vld [vmem:[%s3 + $0x8] sm:$0xff]
      %v1405 = vld [vmem:[%s3 + $0x10] sm:$0xff]
      %v1406 = vld [vmem:[%s3 + $0x18] sm:$0xff]
      %v1407 = vld [vmem:[%s3 + $0x20] sm:$0xff]
      %v1408 = vld [vmem:[%s3 + $0x28] sm:$0xff]
      %v1409 = vld [vmem:[%s3 + $0x30] sm:$0xff]
      %v1410 = vld [vmem:[%s3 + $0x38] sm:$0xff]
      %v1411 = vld [vmem:[%s3 + $0x40] sm:$0xff]
      %v1412 = vld [vmem:[%s3 + $0x48] sm:$0xff]
      %v1413 = vld [vmem:[%s3 + $0x50] sm:$0xff]
      %v1414 = vld [vmem:[%s3 + $0x58] sm:$0xff]
      %v1415 = vld [vmem:[%s3 + $0x60] sm:$0xff]
      %v1416 = vld [vmem:[%s3 + $0x68] sm:$0xff]
      %v1417 = vld [vmem:[%s3 + $0x70] sm:$0xff]
      %v1418 = vld [vmem:[%s3 + $0x78] sm:$0xff]
      %v1419 = vld [vmem:[%s3 + $0x80] sm:$0xff]
      %v1420 = vld [vmem:[%s3 + $0x88] sm:$0xff]
      %v1421 = vld [vmem:[%s3 + $0x90] sm:$0xff]
      %v1422 = vld [vmem:[%s3 + $0x98] sm:$0xff]
      %v1423 = vld [vmem:[%s3 + $0xa0] sm:$0xff]
      %v1424 = vld [vmem:[%s3 + $0xa8] sm:$0xff]
      %v1425 = vld [vmem:[%s3 + $0xb0] sm:$0xff]
      %v1426 = vld [vmem:[%s3 + $0xb8] sm:$0xff]
      %v1427 = vld [vmem:[%s3 + $0xc0] sm:$0xff]
      %v1428 = vld [vmem:[%s3 + $0xc8] sm:$0xff]
      %v1429 = vld [vmem:[%s3 + $0xd0] sm:$0xff]
      %v1430 = vld [vmem:[%s3 + $0xd8] sm:$0xff]
      %v1431 = vld [vmem:[%s3 + $0xe0] sm:$0xff]
      %v1432 = vld [vmem:[%s3 + $0xe8] sm:$0xff]
      %v1433 = vld [vmem:[%s3 + $0xf0] sm:$0xff]
      %v1434 = vld [vmem:[%s3 + $0xf8] sm:$0xff]
      %v1435 = vld [vmem:[%s2] sm:$0xff]
      %v1436 = vld [vmem:[%s2 + $0x8] sm:$0xff]
      %v1437 = vld [vmem:[%s2 + $0x10] sm:$0xff]
      %v1438 = vld [vmem:[%s2 + $0x18] sm:$0xff]
      %v1439 = vld [vmem:[%s2 + $0x20] sm:$0xff]
      %v1440 = vld [vmem:[%s2 + $0x28] sm:$0xff]
      %v1441 = vld [vmem:[%s2 + $0x30] sm:$0xff]
      %v1442 = vld [vmem:[%s2 + $0x38] sm:$0xff]
      %v1443 = vld [vmem:[%s2 + $0x40] sm:$0xff]
      %v1444 = vld [vmem:[%s2 + $0x48] sm:$0xff]
      %v1445 = vld [vmem:[%s2 + $0x50] sm:$0xff]
      %v1446 = vld [vmem:[%s2 + $0x58] sm:$0xff]
      %v1447 = vld [vmem:[%s2 + $0x60] sm:$0xff]
      %v1448 = vld [vmem:[%s2 + $0x68] sm:$0xff]
      %v1449 = vld [vmem:[%s2 + $0x70] sm:$0xff]
      %v1450 = vld [vmem:[%s2 + $0x78] sm:$0xff]
      %v1467 = vunpack.c.l.b16 %v1435
      %v1468 = vunpack.c.h.b16 %v1435
      %v1469 = vunpack.c.l.b16 %v1436
      %v1470 = vunpack.c.h.b16 %v1436
      %v1471 = vunpack.c.l.b16 %v1437
      %v1472 = vunpack.c.h.b16 %v1437
      %v1473 = vunpack.c.l.b16 %v1438
      %v1474 = vunpack.c.h.b16 %v1438
      %v1475 = vunpack.c.l.b16 %v1439
      %v1476 = vunpack.c.h.b16 %v1439
      %v1477 = vunpack.c.l.b16 %v1440
      %v1478 = vunpack.c.h.b16 %v1440
      %v1479 = vunpack.c.l.b16 %v1441
      %v1480 = vunpack.c.h.b16 %v1441
      %v1481 = vunpack.c.l.b16 %v1442
      %v1482 = vunpack.c.h.b16 %v1442
      %v1483 = vunpack.c.l.b16 %v1443
      %v1484 = vunpack.c.h.b16 %v1443
      %v1485 = vunpack.c.l.b16 %v1444
      %v1486 = vunpack.c.h.b16 %v1444
      %v1487 = vunpack.c.l.b16 %v1445
      %v1488 = vunpack.c.h.b16 %v1445
      %v1489 = vunpack.c.l.b16 %v1446
      %v1490 = vunpack.c.h.b16 %v1446
      %v1491 = vunpack.c.l.b16 %v1447
      %v1492 = vunpack.c.h.b16 %v1447
      %v1493 = vunpack.c.l.b16 %v1448
      %v1494 = vunpack.c.h.b16 %v1448
      %v1495 = vunpack.c.l.b16 %v1449
      %v1496 = vunpack.c.h.b16 %v1449
      %v1497 = vunpack.c.l.b16 %v1450
      %v1498 = vunpack.c.h.b16 %v1450
      %v1499 = vpack.c.b16 %v1469, %v1467
      %v1500 = vpack.c.b16 %v1470, %v1468
      %v1501 = vpack.c.b16 %v1473, %v1471
      %v1502 = vpack.c.b16 %v1474, %v1472
      %v1503 = vpack.c.b16 %v1477, %v1475
      %v1504 = vpack.c.b16 %v1478, %v1476
      %v1505 = vpack.c.b16 %v1481, %v1479
      %v1506 = vpack.c.b16 %v1482, %v1480
      %v1507 = vpack.c.b16 %v1485, %v1483
      %v1508 = vpack.c.b16 %v1486, %v1484
      %v1509 = vpack.c.b16 %v1489, %v1487
      %v1510 = vpack.c.b16 %v1490, %v1488
      %v1511 = vpack.c.b16 %v1493, %v1491
      %v1512 = vpack.c.b16 %v1494, %v1492
      %v1513 = vpack.c.b16 %v1497, %v1495
      %v1514 = vpack.c.b16 %v1498, %v1496
      %1531 = vmatpush.bf16.msra.mxu0 %v1513
      %1532 = vmatpush.bf16.msra.mxu0 %v1511
      %1533 = vmatpush.bf16.msra.mxu0 %v1509
      %1534 = vmatpush.bf16.msra.mxu0 %v1507
      %1535 = vmatpush.bf16.msra.mxu0 %v1505
      %1536 = vmatpush.bf16.msra.mxu0 %v1503
      %1537 = vmatpush.bf16.msra.mxu0 %v1501
      %1538 = vmatpush.bf16.msra.mxu0 %v1499
      %1539 = vmatmul.bf16.gmra.mxu0 %v1347
      %v1540 = vpop.f32.mrf.mxu0
      %v1541 = vadd.f32 0.0, %v1540
      %v1542 = vpop.f32.mrf.mxu0
      %v1543 = vadd.f32 0.0, %v1542
      %1544 = vmatmul.bf16.gmra.mxu0 %v1348
      %v1545 = vpop.f32.mrf.mxu0
      %v1546 = vadd.f32 0.0, %v1545
      %v1547 = vpop.f32.mrf.mxu0
      %v1548 = vadd.f32 0.0, %v1547
      %1549 = vmatmul.bf16.gmra.mxu0 %v1349
      %v1550 = vpop.f32.mrf.mxu0
      %v1551 = vadd.f32 0.0, %v1550
      %v1552 = vpop.f32.mrf.mxu0
      %v1553 = vadd.f32 0.0, %v1552
      %1554 = vmatmul.bf16.gmra.mxu0 %v1350
      %v1555 = vpop.f32.mrf.mxu0
      %v1556 = vadd.f32 0.0, %v1555
      %v1557 = vpop.f32.mrf.mxu0
      %v1558 = vadd.f32 0.0, %v1557
      %1559 = vmatmul.bf16.gmra.mxu0 %v1351
      %v1560 = vpop.f32.mrf.mxu0
      %v1561 = vadd.f32 0.0, %v1560
      %v1562 = vpop.f32.mrf.mxu0
      %v1563 = vadd.f32 0.0, %v1562
      %1564 = vmatmul.bf16.gmra.mxu0 %v1352
      %v1565 = vpop.f32.mrf.mxu0
      %v1566 = vadd.f32 0.0, %v1565
      %v1567 = vpop.f32.mrf.mxu0
      %v1568 = vadd.f32 0.0, %v1567
      %1569 = vmatmul.bf16.gmra.mxu0 %v1353
      %v1570 = vpop.f32.mrf.mxu0
      %v1571 = vadd.f32 0.0, %v1570
      %v1572 = vpop.f32.mrf.mxu0
      %v1573 = vadd.f32 0.0, %v1572
      %1574 = vmatmul.bf16.gmra.mxu0 %v1354
      %v1575 = vpop.f32.mrf.mxu0
      %v1576 = vadd.f32 0.0, %v1575
      %v1577 = vpop.f32.mrf.mxu0
      %v1578 = vadd.f32 0.0, %v1577
      %1579 = vdwg.mxu0
      %1580 = vmatpush.bf16.msra.mxu0 %v1514
      %1581 = vmatpush.bf16.msra.mxu0 %v1512
      %1582 = vmatpush.bf16.msra.mxu0 %v1510
      %1583 = vmatpush.bf16.msra.mxu0 %v1508
      %1584 = vmatpush.bf16.msra.mxu0 %v1506
      %1585 = vmatpush.bf16.msra.mxu0 %v1504
      %1586 = vmatpush.bf16.msra.mxu0 %v1502
      %1587 = vmatpush.bf16.msra.mxu0 %v1500
      %1588 = vmatmul.bf16.gmra.mxu0 %v1347
      %v1589 = vpop.f32.mrf.mxu0
      %v1590 = vadd.f32 0.0, %v1589
      %v1591 = vpop.f32.mrf.mxu0
      %v1592 = vadd.f32 0.0, %v1591
      %1593 = vmatmul.bf16.gmra.mxu0 %v1348
      %v1594 = vpop.f32.mrf.mxu0
      %v1595 = vadd.f32 0.0, %v1594
      %v1596 = vpop.f32.mrf.mxu0
      %v1597 = vadd.f32 0.0, %v1596
      %1598 = vmatmul.bf16.gmra.mxu0 %v1349
      %v1599 = vpop.f32.mrf.mxu0
      %v1600 = vadd.f32 0.0, %v1599
      %v1601 = vpop.f32.mrf.mxu0
      %v1602 = vadd.f32 0.0, %v1601
      %1603 = vmatmul.bf16.gmra.mxu0 %v1350
      %v1604 = vpop.f32.mrf.mxu0
      %v1605 = vadd.f32 0.0, %v1604
      %v1606 = vpop.f32.mrf.mxu0
      %v1607 = vadd.f32 0.0, %v1606
      %1608 = vmatmul.bf16.gmra.mxu0 %v1351
      %v1609 = vpop.f32.mrf.mxu0
      %v1610 = vadd.f32 0.0, %v1609
      %v1611 = vpop.f32.mrf.mxu0
      %v1612 = vadd.f32 0.0, %v1611
      %1613 = vmatmul.bf16.gmra.mxu0 %v1352
      %v1614 = vpop.f32.mrf.mxu0
      %v1615 = vadd.f32 0.0, %v1614
      %v1616 = vpop.f32.mrf.mxu0
      %v1617 = vadd.f32 0.0, %v1616
      %1618 = vmatmul.bf16.gmra.mxu0 %v1353
      %v1619 = vpop.f32.mrf.mxu0
      %v1620 = vadd.f32 0.0, %v1619
      %v1621 = vpop.f32.mrf.mxu0
      %v1622 = vadd.f32 0.0, %v1621
      %1623 = vmatmul.bf16.gmra.mxu0 %v1354
      %v1624 = vpop.f32.mrf.mxu0
      %v1625 = vadd.f32 0.0, %v1624
      %v1626 = vpop.f32.mrf.mxu0
      %v1627 = vadd.f32 0.0, %v1626
      %1628 = vdwg.mxu0
      %v1661 = vunpack.c.l.b16 %v1403
      %v1662 = vunpack.c.h.b16 %v1403
      %v1663 = vunpack.c.l.b16 %v1404
      %v1664 = vunpack.c.h.b16 %v1404
      %v1665 = vunpack.c.l.b16 %v1405
      %v1666 = vunpack.c.h.b16 %v1405
      %v1667 = vunpack.c.l.b16 %v1406
      %v1668 = vunpack.c.h.b16 %v1406
      %v1669 = vunpack.c.l.b16 %v1407
      %v1670 = vunpack.c.h.b16 %v1407
      %v1671 = vunpack.c.l.b16 %v1408
      %v1672 = vunpack.c.h.b16 %v1408
      %v1673 = vunpack.c.l.b16 %v1409
      %v1674 = vunpack.c.h.b16 %v1409
      %v1675 = vunpack.c.l.b16 %v1410
      %v1676 = vunpack.c.h.b16 %v1410
      %v1677 = vunpack.c.l.b16 %v1411
      %v1678 = vunpack.c.h.b16 %v1411
      %v1679 = vunpack.c.l.b16 %v1412
      %v1680 = vunpack.c.h.b16 %v1412
      %v1681 = vunpack.c.l.b16 %v1413
      %v1682 = vunpack.c.h.b16 %v1413
      %v1683 = vunpack.c.l.b16 %v1414
      %v1684 = vunpack.c.h.b16 %v1414
      %v1685 = vunpack.c.l.b16 %v1415
      %v1686 = vunpack.c.h.b16 %v1415
      %v1687 = vunpack.c.l.b16 %v1416
      %v1688 = vunpack.c.h.b16 %v1416
      %v1689 = vunpack.c.l.b16 %v1417
      %v1690 = vunpack.c.h.b16 %v1417
      %v1691 = vunpack.c.l.b16 %v1418
      %v1692 = vunpack.c.h.b16 %v1418
      %v1693 = vunpack.c.l.b16 %v1419
      %v1694 = vunpack.c.h.b16 %v1419
      %v1695 = vunpack.c.l.b16 %v1420
      %v1696 = vunpack.c.h.b16 %v1420
      %v1697 = vunpack.c.l.b16 %v1421
      %v1698 = vunpack.c.h.b16 %v1421
      %v1699 = vunpack.c.l.b16 %v1422
      %v1700 = vunpack.c.h.b16 %v1422
      %v1701 = vunpack.c.l.b16 %v1423
      %v1702 = vunpack.c.h.b16 %v1423
      %v1703 = vunpack.c.l.b16 %v1424
      %v1704 = vunpack.c.h.b16 %v1424
      %v1705 = vunpack.c.l.b16 %v1425
      %v1706 = vunpack.c.h.b16 %v1425
      %v1707 = vunpack.c.l.b16 %v1426
      %v1708 = vunpack.c.h.b16 %v1426
      %v1709 = vunpack.c.l.b16 %v1427
      %v1710 = vunpack.c.h.b16 %v1427
      %v1711 = vunpack.c.l.b16 %v1428
      %v1712 = vunpack.c.h.b16 %v1428
      %v1713 = vunpack.c.l.b16 %v1429
      %v1714 = vunpack.c.h.b16 %v1429
      %v1715 = vunpack.c.l.b16 %v1430
      %v1716 = vunpack.c.h.b16 %v1430
      %v1717 = vunpack.c.l.b16 %v1431
      %v1718 = vunpack.c.h.b16 %v1431
      %v1719 = vunpack.c.l.b16 %v1432
      %v1720 = vunpack.c.h.b16 %v1432
      %v1721 = vunpack.c.l.b16 %v1433
      %v1722 = vunpack.c.h.b16 %v1433
      %v1723 = vunpack.c.l.b16 %v1434
      %v1724 = vunpack.c.h.b16 %v1434
      %v1725 = vpack.c.b16 %v1663, %v1661
      %v1726 = vpack.c.b16 %v1664, %v1662
      %v1727 = vpack.c.b16 %v1667, %v1665
      %v1728 = vpack.c.b16 %v1668, %v1666
      %v1729 = vpack.c.b16 %v1671, %v1669
      %v1730 = vpack.c.b16 %v1672, %v1670
      %v1731 = vpack.c.b16 %v1675, %v1673
      %v1732 = vpack.c.b16 %v1676, %v1674
      %v1733 = vpack.c.b16 %v1679, %v1677
      %v1734 = vpack.c.b16 %v1680, %v1678
      %v1735 = vpack.c.b16 %v1683, %v1681
      %v1736 = vpack.c.b16 %v1684, %v1682
      %v1737 = vpack.c.b16 %v1687, %v1685
      %v1738 = vpack.c.b16 %v1688, %v1686
      %v1739 = vpack.c.b16 %v1691, %v1689
      %v1740 = vpack.c.b16 %v1692, %v1690
      %v1741 = vpack.c.b16 %v1695, %v1693
      %v1742 = vpack.c.b16 %v1696, %v1694
      %v1743 = vpack.c.b16 %v1699, %v1697
      %v1744 = vpack.c.b16 %v1700, %v1698
      %v1745 = vpack.c.b16 %v1703, %v1701
      %v1746 = vpack.c.b16 %v1704, %v1702
      %v1747 = vpack.c.b16 %v1707, %v1705
      %v1748 = vpack.c.b16 %v1708, %v1706
      %v1749 = vpack.c.b16 %v1711, %v1709
      %v1750 = vpack.c.b16 %v1712, %v1710
      %v1751 = vpack.c.b16 %v1715, %v1713
      %v1752 = vpack.c.b16 %v1716, %v1714
      %v1753 = vpack.c.b16 %v1719, %v1717
      %v1754 = vpack.c.b16 %v1720, %v1718
      %v1755 = vpack.c.b16 %v1723, %v1721
      %v1756 = vpack.c.b16 %v1724, %v1722
      %1789 = vmatpush.bf16.msra.mxu0 %v1739
      %1790 = vmatpush.bf16.msra.mxu0 %v1737
      %1791 = vmatpush.bf16.msra.mxu0 %v1735
      %1792 = vmatpush.bf16.msra.mxu0 %v1733
      %1793 = vmatpush.bf16.msra.mxu0 %v1731
      %1794 = vmatpush.bf16.msra.mxu0 %v1729
      %1795 = vmatpush.bf16.msra.mxu0 %v1727
      %1796 = vmatpush.bf16.msra.mxu0 %v1725
      %1797 = vmatmul.bf16.gmra.mxu0 %v1387
      %v1798 = vpop.f32.mrf.mxu0
      %v1799 = vadd.f32 %v1541, %v1798
      %v1800 = vpop.f32.mrf.mxu0
      %v1801 = vadd.f32 %v1543, %v1800
      %1802 = vmatmul.bf16.gmra.mxu0 %v1389
      %v1803 = vpop.f32.mrf.mxu0
      %v1804 = vadd.f32 %v1546, %v1803
      %v1805 = vpop.f32.mrf.mxu0
      %v1806 = vadd.f32 %v1548, %v1805
      %1807 = vmatmul.bf16.gmra.mxu0 %v1391
      %v1808 = vpop.f32.mrf.mxu0
      %v1809 = vadd.f32 %v1551, %v1808
      %v1810 = vpop.f32.mrf.mxu0
      %v1811 = vadd.f32 %v1553, %v1810
      %1812 = vmatmul.bf16.gmra.mxu0 %v1393
      %v1813 = vpop.f32.mrf.mxu0
      %v1814 = vadd.f32 %v1556, %v1813
      %v1815 = vpop.f32.mrf.mxu0
      %v1816 = vadd.f32 %v1558, %v1815
      %1817 = vmatmul.bf16.gmra.mxu0 %v1395
      %v1818 = vpop.f32.mrf.mxu0
      %v1819 = vadd.f32 %v1561, %v1818
      %v1820 = vpop.f32.mrf.mxu0
      %v1821 = vadd.f32 %v1563, %v1820
      %1822 = vmatmul.bf16.gmra.mxu0 %v1397
      %v1823 = vpop.f32.mrf.mxu0
      %v1824 = vadd.f32 %v1566, %v1823
      %v1825 = vpop.f32.mrf.mxu0
      %v1826 = vadd.f32 %v1568, %v1825
      %1827 = vmatmul.bf16.gmra.mxu0 %v1399
      %v1828 = vpop.f32.mrf.mxu0
      %v1829 = vadd.f32 %v1571, %v1828
      %v1830 = vpop.f32.mrf.mxu0
      %v1831 = vadd.f32 %v1573, %v1830
      %1832 = vmatmul.bf16.gmra.mxu0 %v1401
      %v1833 = vpop.f32.mrf.mxu0
      %v1834 = vadd.f32 %v1576, %v1833
      %v1835 = vpop.f32.mrf.mxu0
      %v1836 = vadd.f32 %v1578, %v1835
      %1837 = vdwg.mxu0
      %1838 = vmatpush.bf16.msra.mxu0 %v1755
      %1839 = vmatpush.bf16.msra.mxu0 %v1753
      %1840 = vmatpush.bf16.msra.mxu0 %v1751
      %1841 = vmatpush.bf16.msra.mxu0 %v1749
      %1842 = vmatpush.bf16.msra.mxu0 %v1747
      %1843 = vmatpush.bf16.msra.mxu0 %v1745
      %1844 = vmatpush.bf16.msra.mxu0 %v1743
      %1845 = vmatpush.bf16.msra.mxu0 %v1741
      %1846 = vmatmul.bf16.gmra.mxu0 %v1388
      %v1847 = vpop.f32.mrf.mxu0
      %v1848 = vadd.f32 %v1799, %v1847
      %v1849 = vpop.f32.mrf.mxu0
      %v1850 = vadd.f32 %v1801, %v1849
      %1851 = vmatmul.bf16.gmra.mxu0 %v1390
      %v1852 = vpop.f32.mrf.mxu0
      %v1853 = vadd.f32 %v1804, %v1852
      %v1854 = vpop.f32.mrf.mxu0
      %v1855 = vadd.f32 %v1806, %v1854
      %1856 = vmatmul.bf16.gmra.mxu0 %v1392
      %v1857 = vpop.f32.mrf.mxu0
      %v1858 = vadd.f32 %v1809, %v1857
      %v1859 = vpop.f32.mrf.mxu0
      %v1860 = vadd.f32 %v1811, %v1859
      %1861 = vmatmul.bf16.gmra.mxu0 %v1394
      %v1862 = vpop.f32.mrf.mxu0
      %v1863 = vadd.f32 %v1814, %v1862
      %v1864 = vpop.f32.mrf.mxu0
      %v1865 = vadd.f32 %v1816, %v1864
      %1866 = vmatmul.bf16.gmra.mxu0 %v1396
      %v1867 = vpop.f32.mrf.mxu0
      %v1868 = vadd.f32 %v1819, %v1867
      %v1869 = vpop.f32.mrf.mxu0
      %v1870 = vadd.f32 %v1821, %v1869
      %1871 = vmatmul.bf16.gmra.mxu0 %v1398
      %v1872 = vpop.f32.mrf.mxu0
      %v1873 = vadd.f32 %v1824, %v1872
      %v1874 = vpop.f32.mrf.mxu0
      %v1875 = vadd.f32 %v1826, %v1874
      %1876 = vmatmul.bf16.gmra.mxu0 %v1400
      %v1877 = vpop.f32.mrf.mxu0
      %v1878 = vadd.f32 %v1829, %v1877
      %v1879 = vpop.f32.mrf.mxu0
      %v1880 = vadd.f32 %v1831, %v1879
      %1881 = vmatmul.bf16.gmra.mxu0 %v1402
      %v1882 = vpop.f32.mrf.mxu0
      %v1883 = vadd.f32 %v1834, %v1882
      %v1884 = vpop.f32.mrf.mxu0
      %v1885 = vadd.f32 %v1836, %v1884
      %1886 = vdwg.mxu0
      %1887 = vmatpush.bf16.msra.mxu0 %v1740
      %1888 = vmatpush.bf16.msra.mxu0 %v1738
      %1889 = vmatpush.bf16.msra.mxu0 %v1736
      %1890 = vmatpush.bf16.msra.mxu0 %v1734
      %1891 = vmatpush.bf16.msra.mxu0 %v1732
      %1892 = vmatpush.bf16.msra.mxu0 %v1730
      %1893 = vmatpush.bf16.msra.mxu0 %v1728
      %1894 = vmatpush.bf16.msra.mxu0 %v1726
      %1895 = vmatmul.bf16.gmra.mxu0 %v1387
      %v1896 = vpop.f32.mrf.mxu0
      %v1897 = vadd.f32 %v1590, %v1896
      %v1898 = vpop.f32.mrf.mxu0
      %v1899 = vadd.f32 %v1592, %v1898
      %1900 = vmatmul.bf16.gmra.mxu0 %v1389
      %v1901 = vpop.f32.mrf.mxu0
      %v1902 = vadd.f32 %v1595, %v1901
      %v1903 = vpop.f32.mrf.mxu0
      %v1904 = vadd.f32 %v1597, %v1903
      %1905 = vmatmul.bf16.gmra.mxu0 %v1391
      %v1906 = vpop.f32.mrf.mxu0
      %v1907 = vadd.f32 %v1600, %v1906
      %v1908 = vpop.f32.mrf.mxu0
      %v1909 = vadd.f32 %v1602, %v1908
      %1910 = vmatmul.bf16.gmra.mxu0 %v1393
      %v1911 = vpop.f32.mrf.mxu0
      %v1912 = vadd.f32 %v1605, %v1911
      %v1913 = vpop.f32.mrf.mxu0
      %v1914 = vadd.f32 %v1607, %v1913
      %1915 = vmatmul.bf16.gmra.mxu0 %v1395
      %v1916 = vpop.f32.mrf.mxu0
      %v1917 = vadd.f32 %v1610, %v1916
      %v1918 = vpop.f32.mrf.mxu0
      %v1919 = vadd.f32 %v1612, %v1918
      %1920 = vmatmul.bf16.gmra.mxu0 %v1397
      %v1921 = vpop.f32.mrf.mxu0
      %v1922 = vadd.f32 %v1615, %v1921
      %v1923 = vpop.f32.mrf.mxu0
      %v1924 = vadd.f32 %v1617, %v1923
      %1925 = vmatmul.bf16.gmra.mxu0 %v1399
      %v1926 = vpop.f32.mrf.mxu0
      %v1927 = vadd.f32 %v1620, %v1926
      %v1928 = vpop.f32.mrf.mxu0
      %v1929 = vadd.f32 %v1622, %v1928
      %1930 = vmatmul.bf16.gmra.mxu0 %v1401
      %v1931 = vpop.f32.mrf.mxu0
      %v1932 = vadd.f32 %v1625, %v1931
      %v1933 = vpop.f32.mrf.mxu0
      %v1934 = vadd.f32 %v1627, %v1933
      %1935 = vdwg.mxu0
      %1936 = vmatpush.bf16.msra.mxu0 %v1756
      %1937 = vmatpush.bf16.msra.mxu0 %v1754
      %1938 = vmatpush.bf16.msra.mxu0 %v1752
      %1939 = vmatpush.bf16.msra.mxu0 %v1750
      %1940 = vmatpush.bf16.msra.mxu0 %v1748
      %1941 = vmatpush.bf16.msra.mxu0 %v1746
      %1942 = vmatpush.bf16.msra.mxu0 %v1744
      %1943 = vmatpush.bf16.msra.mxu0 %v1742
      %1944 = vmatmul.bf16.gmra.mxu0 %v1388
      %v1945 = vpop.f32.mrf.mxu0
      %v1946 = vadd.f32 %v1897, %v1945
      %v1947 = vpop.f32.mrf.mxu0
      %v1948 = vadd.f32 %v1899, %v1947
      %1949 = vmatmul.bf16.gmra.mxu0 %v1390
      %v1950 = vpop.f32.mrf.mxu0
      %v1951 = vadd.f32 %v1902, %v1950
      %v1952 = vpop.f32.mrf.mxu0
      %v1953 = vadd.f32 %v1904, %v1952
      %1954 = vmatmul.bf16.gmra.mxu0 %v1392
      %v1955 = vpop.f32.mrf.mxu0
      %v1956 = vadd.f32 %v1907, %v1955
      %v1957 = vpop.f32.mrf.mxu0
      %v1958 = vadd.f32 %v1909, %v1957
      %1959 = vmatmul.bf16.gmra.mxu0 %v1394
      %v1960 = vpop.f32.mrf.mxu0
      %v1961 = vadd.f32 %v1912, %v1960
      %v1962 = vpop.f32.mrf.mxu0
      %v1963 = vadd.f32 %v1914, %v1962
      %1964 = vmatmul.bf16.gmra.mxu0 %v1396
      %v1965 = vpop.f32.mrf.mxu0
      %v1966 = vadd.f32 %v1917, %v1965
      %v1967 = vpop.f32.mrf.mxu0
      %v1968 = vadd.f32 %v1919, %v1967
      %1969 = vmatmul.bf16.gmra.mxu0 %v1398
      %v1970 = vpop.f32.mrf.mxu0
      %v1971 = vadd.f32 %v1922, %v1970
      %v1972 = vpop.f32.mrf.mxu0
      %v1973 = vadd.f32 %v1924, %v1972
      %1974 = vmatmul.bf16.gmra.mxu0 %v1400
      %v1975 = vpop.f32.mrf.mxu0
      %v1976 = vadd.f32 %v1927, %v1975
      %v1977 = vpop.f32.mrf.mxu0
      %v1978 = vadd.f32 %v1929, %v1977
      %1979 = vmatmul.bf16.gmra.mxu0 %v1402
      %v1980 = vpop.f32.mrf.mxu0
      %v1981 = vadd.f32 %v1932, %v1980
      %v1982 = vpop.f32.mrf.mxu0
      %v1983 = vadd.f32 %v1934, %v1982
      %1984 = vdwg.mxu0
      %v1985 = vld [vmem:[%s5] sm:$0x3]
      %v1987 = vperm.slane %v1985, 0
      %v1988 = vperm.slane %v1985, 1
      %v1991 = vadd.f32 %v1848, %v1987
      %v1992 = vadd.f32 %v1946, %v1988
      %v1993 = vadd.f32 %v1850, %v1987
      %v1994 = vadd.f32 %v1948, %v1988
      %v1995 = vadd.f32 %v1853, %v1987
      %v1996 = vadd.f32 %v1951, %v1988
      %v1997 = vadd.f32 %v1855, %v1987
      %v1998 = vadd.f32 %v1953, %v1988
      %v1999 = vadd.f32 %v1858, %v1987
      %v2000 = vadd.f32 %v1956, %v1988
      %v2001 = vadd.f32 %v1860, %v1987
      %v2002 = vadd.f32 %v1958, %v1988
      %v2003 = vadd.f32 %v1863, %v1987
      %v2004 = vadd.f32 %v1961, %v1988
      %v2005 = vadd.f32 %v1865, %v1987
      %v2006 = vadd.f32 %v1963, %v1988
      %v2007 = vadd.f32 %v1868, %v1987
      %v2008 = vadd.f32 %v1966, %v1988
      %v2009 = vadd.f32 %v1870, %v1987
      %v2010 = vadd.f32 %v1968, %v1988
      %v2011 = vadd.f32 %v1873, %v1987
      %v2012 = vadd.f32 %v1971, %v1988
      %v2013 = vadd.f32 %v1875, %v1987
      %v2014 = vadd.f32 %v1973, %v1988
      %v2015 = vadd.f32 %v1878, %v1987
      %v2016 = vadd.f32 %v1976, %v1988
      %v2017 = vadd.f32 %v1880, %v1987
      %v2018 = vadd.f32 %v1978, %v1988
      %v2019 = vadd.f32 %v1883, %v1987
      %v2020 = vadd.f32 %v1981, %v1988
      %v2021 = vadd.f32 %v1885, %v1987
      %v2022 = vadd.f32 %v1983, %v1988
      %v2023 = vmax.f32 %v1991, 0.0
      %v2024 = vmax.f32 %v1992, 0.0
      %v2025 = vmax.f32 %v1993, 0.0
      %v2026 = vmax.f32 %v1994, 0.0
      %v2027 = vmax.f32 %v1995, 0.0
      %v2028 = vmax.f32 %v1996, 0.0
      %v2029 = vmax.f32 %v1997, 0.0
      %v2030 = vmax.f32 %v1998, 0.0
      %v2031 = vmax.f32 %v1999, 0.0
      %v2032 = vmax.f32 %v2000, 0.0
      %v2033 = vmax.f32 %v2001, 0.0
      %v2034 = vmax.f32 %v2002, 0.0
      %v2035 = vmax.f32 %v2003, 0.0
      %v2036 = vmax.f32 %v2004, 0.0
      %v2037 = vmax.f32 %v2005, 0.0
      %v2038 = vmax.f32 %v2006, 0.0
      %v2039 = vmax.f32 %v2007, 0.0
      %v2040 = vmax.f32 %v2008, 0.0
      %v2041 = vmax.f32 %v2009, 0.0
      %v2042 = vmax.f32 %v2010, 0.0
      %v2043 = vmax.f32 %v2011, 0.0
      %v2044 = vmax.f32 %v2012, 0.0
      %v2045 = vmax.f32 %v2013, 0.0
      %v2046 = vmax.f32 %v2014, 0.0
      %v2047 = vmax.f32 %v2015, 0.0
      %v2048 = vmax.f32 %v2016, 0.0
      %v2049 = vmax.f32 %v2017, 0.0
      %v2050 = vmax.f32 %v2018, 0.0
      %v2051 = vmax.f32 %v2019, 0.0
      %v2052 = vmax.f32 %v2020, 0.0
      %v2053 = vmax.f32 %v2021, 0.0
      %v2054 = vmax.f32 %v2022, 0.0
      %2055 = vst [vmem:[%s280] sm:$0xff] %v2023
      %2056 = vst [vmem:[%s280 + $0x8] sm:$0xff] %v2024
      %2057 = vst [vmem:[%s280 + $0x10] sm:$0xff] %v2025
      %2058 = vst [vmem:[%s280 + $0x18] sm:$0xff] %v2026
      %2059 = vst [vmem:[%s280 + $0x20] sm:$0xff] %v2027
      %2060 = vst [vmem:[%s280 + $0x28] sm:$0xff] %v2028
      %2061 = vst [vmem:[%s280 + $0x30] sm:$0xff] %v2029
      %2062 = vst [vmem:[%s280 + $0x38] sm:$0xff] %v2030
      %2063 = vst [vmem:[%s280 + $0x40] sm:$0xff] %v2031
      %2064 = vst [vmem:[%s280 + $0x48] sm:$0xff] %v2032
      %2065 = vst [vmem:[%s280 + $0x50] sm:$0xff] %v2033
      %2066 = vst [vmem:[%s280 + $0x58] sm:$0xff] %v2034
      %2067 = vst [vmem:[%s280 + $0x60] sm:$0xff] %v2035
      %2068 = vst [vmem:[%s280 + $0x68] sm:$0xff] %v2036
      %2069 = vst [vmem:[%s280 + $0x70] sm:$0xff] %v2037
      %2070 = vst [vmem:[%s280 + $0x78] sm:$0xff] %v2038
      %2071 = vst [vmem:[%s280 + $0x80] sm:$0xff] %v2039
      %2072 = vst [vmem:[%s280 + $0x88] sm:$0xff] %v2040
      %2073 = vst [vmem:[%s280 + $0x90] sm:$0xff] %v2041
      %2074 = vst [vmem:[%s280 + $0x98] sm:$0xff] %v2042
      %2075 = vst [vmem:[%s280 + $0xa0] sm:$0xff] %v2043
      %2076 = vst [vmem:[%s280 + $0xa8] sm:$0xff] %v2044
      %2077 = vst [vmem:[%s280 + $0xb0] sm:$0xff] %v2045
      %2078 = vst [vmem:[%s280 + $0xb8] sm:$0xff] %v2046
      %2079 = vst [vmem:[%s280 + $0xc0] sm:$0xff] %v2047
      %2080 = vst [vmem:[%s280 + $0xc8] sm:$0xff] %v2048
      %2081 = vst [vmem:[%s280 + $0xd0] sm:$0xff] %v2049
      %2082 = vst [vmem:[%s280 + $0xd8] sm:$0xff] %v2050
      %2083 = vst [vmem:[%s280 + $0xe0] sm:$0xff] %v2051
      %2084 = vst [vmem:[%s280 + $0xe8] sm:$0xff] %v2052
      %2085 = vst [vmem:[%s280 + $0xf0] sm:$0xff] %v2053
      %2086 = vst [vmem:[%s280 + $0xf8] sm:$0xff] %v2054
      %s2087 = smul.u32 16, %s17
      %p2088 = scmp.lt.s32.totalorder %s2087, 31
      %s2089 = scalar_select %p2088, %s2087, 31
      %s2090 = smul.addr %s2089, 2
      %s2091 = smul.addr %s2090, 8
      %s2092 = scalar_lea.vmem %s6, %s2091
      // Predicated region
      $region45: #{sample_embedding_net_forward.1} parent=43 // pred_check
        %p2093 = pneg %p171
      $region46: #{sample_embedding_net_forward.1} parent=43 // pred_check_branch
        %2095 = sbr.rel (%p2093) target = $region48
      $region47: #{sample_embedding_net_forward.1} parent=43 // pred_region
        %s2096 = smul.u32 16, %s17
      $region48: #{sample_embedding_net_forward.1} parent=43 // pred_fallthru
        _
    $region44: #{sample_embedding_net_forward.1} parent=5 // pred_fallthru
      _
    %p2097 = scmp.le.s32.totalorder 2, %s12
    // Predicated region
    $region49: #{sample_embedding_net_forward.1} parent=5 // pred_check
      %p2098 = pneg %p2097
    $region50: #{sample_embedding_net_forward.1} parent=5 // pred_check_branch
      %2100 = sbr.rel (%p2098) target = $region52
    $region51: #{sample_embedding_net_forward.1} parent=5 // pred_region
      %s2101 = ssub.s32 %s12, 2
      // Predicated region
      $region53: #{sample_embedding_net_forward.1} parent=51 // pred_check
        %p2102 = pneg %p177
      $region54: #{sample_embedding_net_forward.1} parent=51 // pred_check_branch
        %2104 = sbr.rel (%p2102) target = $region56
      $region55: #{sample_embedding_net_forward.1} parent=51 // pred_region
        %s2105 = smul.u32 16, %s18
        %p2106 = scmp.lt.s32.totalorder %s2105, 31
        %s2107 = scalar_select %p2106, %s2105, 31
        %s2108 = smul.addr %s2107, 2
        %s2109 = smul.addr %s2108, 8
        %s2110 = scalar_lea.vmem %s6, %s2109
      $region56: #{sample_embedding_net_forward.1} parent=51 // pred_fallthru
        _
    $region52: #{sample_embedding_net_forward.1} parent=5 // pred_fallthru
      _
  $region6: #{sample_embedding_net_forward.1} parent=0 // loop_footer
    %s16 = sadd.s32 1, %s12
  $region7: #{sample_embedding_net_forward.1} parent=0 // loop_footer_branch
    %11 = sbr.rel target = $region3
  $region8: #{sample_embedding_net_forward.1} parent=0 // loop_exit
    _

</llo_original>
